<compile_context>
chip_gen: v5e
topology: v5e:2x2
jax: 0.10.0
libtpu: 0.0.40
codegen_flags: <defaults>
</compile_context>

<pallas_src>
import functools
import math

import jax
import jax.numpy as jnp
from jax import lax
from jax.experimental import pallas as pl
from jax.experimental.pallas import tpu as pltpu


def _round_up(x, m):
    return (x + m - 1) // m * m


# ----------------------------- Pallas kernel -------------------------------

def gru_layer_kernel(x_ref, len_ref, wih_ref, whh_ref, bih_ref, bhh_ref,
                     out_ref, gi_ref, h_ref, *, last_layer):
    """One full GRU layer (all timesteps) in a single kernel invocation.

    x_ref   : (T*B, Din)  f32   layer input, time-major, flattened over (T, B)
    len_ref : (B, 1)      i32   true sequence lengths (0 for padded batch rows)
    wih_ref : (Din, 3H)   bf16  input->hidden weights (gate blocks r|z|n, each H wide)
    whh_ref : (H, 3H)     bf16  hidden->hidden weights
    bih_ref : (1, 3H)     f32
    bhh_ref : (1, 3H)     f32
    out_ref : (T*B, H) f32 (intermediate layer)   or   (B, H) f32 (last layer)
    gi_ref  : (T*B, 3H)   f32   VMEM scratch: precomputed input projection
    h_ref   : (B, H)      f32   VMEM scratch: carried hidden state
    """
    B, H = h_ref.shape
    T = x_ref.shape[0] // B

    # ---- Pass 1: hoisted input projection — one well-shaped bf16 MXU matmul. ----
    gi_ref[...] = (
        jnp.dot(x_ref[...].astype(jnp.bfloat16), wih_ref[...],
                preferred_element_type=jnp.float32)
        + bih_ref[...]                       # b_ih folded in once, outside the loop
    )

    # ---- Pass 2: sequential time recurrence, fully VMEM-resident. ----
    h_ref[...] = jnp.zeros_like(h_ref)
    whh = whh_ref[...]                       # loop-invariant bf16 weights (hoisted)
    bhh = bhh_ref[...]
    lens = len_ref[...]

    def step(t, carry):
        h = h_ref[...]
        row = pl.multiple_of(t * B, B)       # sublane-aligned (B is a multiple of 8)
        gi_t = gi_ref[pl.ds(row, B), :]      # (B, 3H) f32

        gh = jnp.dot(h.astype(jnp.bfloat16), whh,
                     preferred_element_type=jnp.float32) + bhh

        # Gate slices fall on 128-lane boundaries (H is a multiple of 128).
        r = jax.nn.sigmoid(gi_t[:, 0:H] + gh[:, 0:H])
        z = jax.nn.sigmoid(gi_t[:, H:2 * H] + gh[:, H:2 * H])
        n = jnp.tanh(gi_t[:, 2 * H:3 * H] + r * gh[:, 2 * H:3 * H])
        h_new = (1.0 - z) * n + z * h

        # pack_padded_sequence emulation: freeze hidden state once t >= length.
        h_out = jnp.where(t < lens, h_new, h)
        h_ref[...] = h_out
        if not last_layer:
            out_ref[pl.ds(row, B), :] = h_out    # lane-dense store (H = k*128)
        return carry

    # Short fixed trip count -> unroll so the LLO scheduler sees the whole loop.
    lax.fori_loop(0, T, step, 0, unroll=(T <= 16))

    if last_layer:
        # Final hidden == top-layer output at t = l[i]-1 (state frozen past length):
        # only (B, H) leaves the kernel, no (T, B, H) HBM writeback for the top layer.
        out_ref[...] = h_ref[...]


def gru_layer_pallas(x_2d, lens_b1, wih_t, whh_t, bih, bhh, *, batch_pad, last_layer):
    """Run one GRU layer over all timesteps with a single grid-less pallas_call.

    x_2d    : (T*B_pad, Din_pad) f32, time-major flattened
    lens_b1 : (B_pad, 1) int32
    wih_t   : (Din_pad, 3*H_pad) bf16
    whh_t   : (H_pad, 3*H_pad)   bf16
    bih/bhh : (1, 3*H_pad)       f32
    returns : (T*B_pad, H_pad) f32, or (B_pad, H_pad) f32 if last_layer
    """
    TB, _ = x_2d.shape
    H_pad = whh_t.shape[0]

    if last_layer:
        out_shape = jax.ShapeDtypeStruct((batch_pad, H_pad), jnp.float32)
    else:
        out_shape = jax.ShapeDtypeStruct((TB, H_pad), jnp.float32)

    kernel = functools.partial(gru_layer_kernel, last_layer=last_layer)

    # Everything (inputs, gi scratch, h, output) is VMEM-resident for the whole layer.
    # At realistic sizes (large H / T) one would tile the 3H axis of the hoisted
    # matmul and set pltpu.CompilerParams(vmem_limit_bytes=...) — v7x only has 64 MiB
    # physical VMEM — but at these shapes the 32 MiB scoped default is ample.
    return pl.pallas_call(
        kernel,
        out_shape=out_shape,
        scratch_shapes=[
            pltpu.VMEM((TB, 3 * H_pad), jnp.float32),       # gi (input projection)
            pltpu.VMEM((batch_pad, H_pad), jnp.float32),    # carried hidden state
        ],
    )(x_2d, lens_b1, wih_t, whh_t, bih, bhh)


# ----------------------------- weight preparation ---------------------------

def _pad_layer_params(w_ih, w_hh, b_ih, b_hh, din_pad, h_pad):
    """Torch-layout (3H, Din)/(3H, H) weights -> transposed, gate-block-padded,
    bf16 matmul operands with each gate block padded to h_pad lanes."""
    H = w_hh.shape[1]
    Din = w_ih.shape[1]
    wih_t = jnp.zeros((din_pad, 3 * h_pad), jnp.float32)
    whh_t = jnp.zeros((h_pad, 3 * h_pad), jnp.float32)
    bih = jnp.zeros((1, 3 * h_pad), jnp.float32)
    bhh = jnp.zeros((1, 3 * h_pad), jnp.float32)
    for g in range(3):                          # gate order r, z, n (PyTorch)
        c0 = g * h_pad
        wih_t = wih_t.at[:Din, c0:c0 + H].set(w_ih[g * H:(g + 1) * H, :].T)
        whh_t = whh_t.at[:H, c0:c0 + H].set(w_hh[g * H:(g + 1) * H, :].T)
        bih = bih.at[0, c0:c0 + H].set(b_ih[g * H:(g + 1) * H])
        bhh = bhh.at[0, c0:c0 + H].set(b_hh[g * H:(g + 1) * H])
    # bf16 weights into the MXU (f32 accumulation in-kernel); biases stay f32.
    return wih_t.astype(jnp.bfloat16), whh_t.astype(jnp.bfloat16), bih, bhh


# --------------------------------- forward ----------------------------------

def gru_forward(X, l, params):
    """Equivalent of GRU.forward(X, l).

    X      : (B, T, d_model) float32
    l      : (B,) int32 true lengths
    params : list of (w_ih, w_hh, b_ih, b_hh) per layer (torch layout)
    returns: (B, hidden_size) float32
    """
    B, T, D = X.shape
    H = params[-1][1].shape[1]
    B_pad = _round_up(B, 8)        # sublanes
    H_pad = _round_up(H, 128)      # lanes
    D_pad = _round_up(D, 128)

    # Time-major, pad batch (sublanes) + features (lanes), fold T into the matmul M dim.
    x = jnp.transpose(X, (1, 0, 2))                               # (T, B, D)
    x = jnp.pad(x, ((0, 0), (0, B_pad - B), (0, D_pad - D)))
    x = x.reshape(T * B_pad, D_pad)

    # Padded batch rows get length 0 -> their hidden state stays zero.
    lens = jnp.zeros((B_pad, 1), jnp.int32).at[:B, 0].set(l.astype(jnp.int32))

    n_layers = len(params)
    out = None
    for i, (w_ih, w_hh, b_ih, b_hh) in enumerate(params):
        din_pad = D_pad if i == 0 else H_pad
        wih_t, whh_t, bih, bhh = _pad_layer_params(w_ih, w_hh, b_ih, b_hh, din_pad, H_pad)
        last = (i == n_layers - 1)
        out = gru_layer_pallas(x, lens, wih_t, whh_t, bih, bhh,
                               batch_pad=B_pad, last_layer=last)
        if not last:
            x = out
        # TODO(synk): nn.GRU inter-layer dropout (p=0.3) is training-only; skipped.

    return out[:B, :H]             # final hidden of top layer == X[i, l[i]-1, :]


# ---------------------------- pure-JAX reference ----------------------------

def gru_forward_ref(X, l, params, matmul_dtype=jnp.float32):
    """Reference GRU. matmul_dtype=bf16 mirrors the kernel's MXU precision."""
    B, T, _ = X.shape
    lens = l.reshape(B, 1).astype(jnp.int32)
    x = X
    h_final = None
    for (w_ih, w_hh, b_ih, b_hh) in params:
        H = w_hh.shape[1]
        wih_t = w_ih.T.astype(matmul_dtype)
        whh_t = w_hh.T.astype(matmul_dtype)

        def step(h, inp):
            x_t, t = inp
            gi = jnp.dot(x_t.astype(matmul_dtype), wih_t,
                         preferred_element_type=jnp.float32) + b_ih
            gh = jnp.dot(h.astype(matmul_dtype), whh_t,
                         preferred_element_type=jnp.float32) + b_hh
            r = jax.nn.sigmoid(gi[:, :H] + gh[:, :H])
            z = jax.nn.sigmoid(gi[:, H:2 * H] + gh[:, H:2 * H])
            n = jnp.tanh(gi[:, 2 * H:] + r * gh[:, 2 * H:])
            h_new = (1.0 - z) * n + z * h
            h_out = jnp.where(t < lens, h_new, h)
            return h_out, h_out

        h0 = jnp.zeros((B, H), jnp.float32)
        h_final, ys = lax.scan(step, h0, (jnp.transpose(x, (1, 0, 2)), jnp.arange(T)))
        x = jnp.transpose(ys, (1, 0, 2))
    return h_final                  # == gathered X[i, l[i]-1, :] of the top layer


# --------------------------------- driver -----------------------------------

def init_gru_params(key, d_model, hidden_size, num_layer):
    """Deterministic init matching nn.GRU shapes: U(-1/sqrt(H), 1/sqrt(H))."""
    params = []
    bound = 1.0 / math.sqrt(hidden_size)
    for layer in range(num_layer):
        din = d_model if layer == 0 else hidden_size
        key, k1, k2, k3, k4 = jax.random.split(key, 5)
        w_ih = jax.random.uniform(k1, (3 * hidden_size, din), jnp.float32, -bound, bound)
        w_hh = jax.random.uniform(k2, (3 * hidden_size, hidden_size), jnp.float32, -bound, bound)
        b_ih = jax.random.uniform(k3, (3 * hidden_size,), jnp.float32, -bound, bound)
        b_hh = jax.random.uniform(k4, (3 * hidden_size,), jnp.float32, -bound, bound)
        params.append((w_ih, w_hh, b_ih, b_hh))
    return params


if __name__ == "__main__":
    d_model = 16
    hidden_size = 32
    num_layer = 2
    batch = 2
    max_len = 8

    key = jax.random.PRNGKey(0)
    kx, kp = jax.random.split(key)
    X = jax.random.normal(kx, (batch, max_len, d_model), jnp.float32)
    l = jnp.array([5, 8], dtype=jnp.int32)      # true length per sentence

    params = init_gru_params(kp, d_model, hidden_size, num_layer)

    out = jax.block_until_ready(gru_forward(X, l, params))
    assert out.shape == (batch, hidden_size), out.shape

    # Check 1: reference mirroring the kernel precision (bf16 MXU inputs, f32 accum).
    ref_bf16 = jax.block_until_ready(gru_forward_ref(X, l, params, jnp.bfloat16))
    diff_b = float(jnp.max(jnp.abs(out - ref_bf16)))
    assert jnp.allclose(out, ref_bf16, atol=1e-2, rtol=1e-2), f"bf16-ref max diff {diff_b}"

    # Check 2: pure-f32 (PyTorch-semantics) reference; tolerance sized for the
    # bf16-input matmul precision envelope.
    ref_f32 = jax.block_until_ready(gru_forward_ref(X, l, params, jnp.float32))
    diff_f = float(jnp.max(jnp.abs(out - ref_f32)))
    assert jnp.allclose(out, ref_f32, atol=6e-2, rtol=6e-2), f"f32-ref max diff {diff_f}"

    print("KERNEL_OK")
</pallas_src>

<mosaic_0001>
module attributes {stable_mosaic.version = 11 : i64} {
  func.func @gru_layer_kernel(%arg0: memref<64x128xf32, #tpu.memory_space<vmem>>, %arg1: memref<8x1xi32, #tpu.memory_space<vmem>>, %arg2: memref<128x384xbf16, #tpu.memory_space<vmem>>, %arg3: memref<128x384xbf16, #tpu.memory_space<vmem>>, %arg4: memref<1x384xf32, #tpu.memory_space<vmem>>, %arg5: memref<1x384xf32, #tpu.memory_space<vmem>>, %arg6: memref<64x128xf32, #tpu.memory_space<vmem>>, %arg7: memref<64x384xf32, #tpu.memory_space<vmem>>, %arg8: memref<8x128xf32, #tpu.memory_space<vmem>>) attributes {dimension_semantics = [], scalar_prefetch = 0 : i64, scratch_operands = 2 : i64, tpu.core_type = #tpu.core_type<tc>} {
    %c0 = arith.constant 0 : index
    %c0_0 = arith.constant 0 : index
    %0 = vector.load %arg0[%c0, %c0_0] : memref<64x128xf32, #tpu.memory_space<vmem>>, vector<64x128xf32>
    %1 = arith.truncf %0 : vector<64x128xf32> to vector<64x128xbf16>
    %c0_1 = arith.constant 0 : index
    %c0_2 = arith.constant 0 : index
    %2 = vector.load %arg2[%c0_1, %c0_2] : memref<128x384xbf16, #tpu.memory_space<vmem>>, vector<128x384xbf16>
    %cst = arith.constant dense<0.000000e+00> : vector<64x384xf32>
    %3 = tpu.matmul %1, %2, %cst {dimension_numbers = #tpu.dot_dimension_numbers<[1], [0], [0], [1], [0, 0, 1, 1], [], []>} : vector<64x128xbf16>, vector<128x384xbf16>, vector<64x384xf32> -> vector<64x384xf32>
    %c0_3 = arith.constant 0 : index
    %c0_4 = arith.constant 0 : index
    %4 = vector.load %arg4[%c0_3, %c0_4] : memref<1x384xf32, #tpu.memory_space<vmem>>, vector<1x384xf32>
    %5 = vector.broadcast %4 : vector<1x384xf32> to vector<64x384xf32>
    %6 = arith.addf %3, %5 : vector<64x384xf32>
    %c0_5 = arith.constant 0 : index
    %c0_6 = arith.constant 0 : index
    %7 = vector.load %arg7[%c0_5, %c0_6] : memref<64x384xf32, #tpu.memory_space<vmem>>, vector<64x384xf32>
    tpu.vector_store %arg7[%c0_5, %c0_6], %6 {strides = array<i32>} : memref<64x384xf32, #tpu.memory_space<vmem>>, vector<64x384xf32>,
    %cst_7 = arith.constant 0.000000e+00 : f32
    %8 = vector.broadcast %cst_7 : f32 to vector<8x128xf32>
    %c0_8 = arith.constant 0 : index
    %c0_9 = arith.constant 0 : index
    %9 = vector.load %arg8[%c0_8, %c0_9] : memref<8x128xf32, #tpu.memory_space<vmem>>, vector<8x128xf32>
    tpu.vector_store %arg8[%c0_8, %c0_9], %8 {strides = array<i32>} : memref<8x128xf32, #tpu.memory_space<vmem>>, vector<8x128xf32>,
    %c0_10 = arith.constant 0 : index
    %c0_11 = arith.constant 0 : index
    %10 = vector.load %arg3[%c0_10, %c0_11] : memref<128x384xbf16, #tpu.memory_space<vmem>>, vector<128x384xbf16>
    %c0_12 = arith.constant 0 : index
    %c0_13 = arith.constant 0 : index
    %11 = vector.load %arg5[%c0_12, %c0_13] : memref<1x384xf32, #tpu.memory_space<vmem>>, vector<1x384xf32>
    %c0_14 = arith.constant 0 : index
    %c0_15 = arith.constant 0 : index
    %12 = vector.load %arg1[%c0_14, %c0_15] : memref<8x1xi32, #tpu.memory_space<vmem>>, vector<8x1xi32>
    %c0_i32 = arith.constant 0 : i32
    %c0_16 = arith.constant 0 : index
    %c0_17 = arith.constant 0 : index
    %13 = vector.load %arg8[%c0_16, %c0_17] : memref<8x128xf32, #tpu.memory_space<vmem>>, vector<8x128xf32>
    %c8_i32 = arith.constant 8 : i32
    %14 = arith.muli %c0_i32, %c8_i32 : i32
    %15 = tpu.assume_multiple %14, 8 : i32
    %16 = arith.index_cast %15 : i32 to index
    %c0_18 = arith.constant 0 : index
    %17 = vector.load %arg7[%16, %c0_18] : memref<64x384xf32, #tpu.memory_space<vmem>>, vector<8x384xf32>
    %18 = arith.truncf %13 : vector<8x128xf32> to vector<8x128xbf16>
    %cst_19 = arith.constant dense<0.000000e+00> : vector<8x384xf32>
    %19 = tpu.matmul %18, %10, %cst_19 {dimension_numbers = #tpu.dot_dimension_numbers<[1], [0], [0], [1], [0, 0, 1, 1], [], []>} : vector<8x128xbf16>, vector<128x384xbf16>, vector<8x384xf32> -> vector<8x384xf32>
    %20 = vector.broadcast %11 : vector<1x384xf32> to vector<8x384xf32>
    %21 = arith.addf %19, %20 : vector<8x384xf32>
    %22 = vector.extract_strided_slice %17 {offsets = [0, 0], sizes = [8, 128], strides = [1, 1]} : vector<8x384xf32> to vector<8x128xf32>
    %23 = vector.extract_strided_slice %21 {offsets = [0, 0], sizes = [8, 128], strides = [1, 1]} : vector<8x384xf32> to vector<8x128xf32>
    %24 = arith.addf %22, %23 : vector<8x128xf32>
    %25 = arith.negf %24 : vector<8x128xf32>
    %26 = math.exp %25 : vector<8x128xf32>
    %cst_20 = arith.constant 1.000000e+00 : f32
    %27 = vector.broadcast %cst_20 : f32 to vector<8x128xf32>
    %28 = arith.addf %27, %26 : vector<8x128xf32>
    %29 = arith.divf %27, %28 : vector<8x128xf32>
    %30 = vector.extract_strided_slice %17 {offsets = [0, 128], sizes = [8, 128], strides = [1, 1]} : vector<8x384xf32> to vector<8x128xf32>
    %31 = vector.extract_strided_slice %21 {offsets = [0, 128], sizes = [8, 128], strides = [1, 1]} : vector<8x384xf32> to vector<8x128xf32>
    %32 = arith.addf %30, %31 : vector<8x128xf32>
    %33 = arith.negf %32 : vector<8x128xf32>
    %34 = math.exp %33 : vector<8x128xf32>
    %cst_21 = arith.constant 1.000000e+00 : f32
    %35 = vector.broadcast %cst_21 : f32 to vector<8x128xf32>
    %36 = arith.addf %35, %34 : vector<8x128xf32>
    %37 = arith.divf %35, %36 : vector<8x128xf32>
    %38 = vector.extract_strided_slice %17 {offsets = [0, 256], sizes = [8, 128], strides = [1, 1]} : vector<8x384xf32> to vector<8x128xf32>
    %39 = vector.extract_strided_slice %21 {offsets = [0, 256], sizes = [8, 128], strides = [1, 1]} : vector<8x384xf32> to vector<8x128xf32>
    %40 = arith.mulf %29, %39 : vector<8x128xf32>
    %41 = arith.addf %38, %40 : vector<8x128xf32>
    %42 = math.tanh %41 : vector<8x128xf32>
    %cst_22 = arith.constant 1.000000e+00 : f32
    %43 = vector.broadcast %cst_22 : f32 to vector<8x128xf32>
    %44 = arith.subf %43, %37 : vector<8x128xf32>
    %45 = arith.mulf %44, %42 : vector<8x128xf32>
    %46 = arith.mulf %37, %13 : vector<8x128xf32>
    %47 = arith.addf %45, %46 : vector<8x128xf32>
    %48 = vector.broadcast %c0_i32 : i32 to vector<8x1xi32>
    %49 = arith.cmpi slt, %48, %12 : vector<8x1xi32>
    %50 = vector.shape_cast %49 : vector<8x1xi1> to vector<8x1xi1>
    %51 = vector.broadcast %50 : vector<8x1xi1> to vector<8x128xi1>
    %52 = arith.select %51, %47, %13 : vector<8x128xi1>, vector<8x128xf32>
    %c0_23 = arith.constant 0 : index
    %c0_24 = arith.constant 0 : index
    %53 = vector.load %arg8[%c0_23, %c0_24] : memref<8x128xf32, #tpu.memory_space<vmem>>, vector<8x128xf32>
    tpu.vector_store %arg8[%c0_23, %c0_24], %52 {strides = array<i32>} : memref<8x128xf32, #tpu.memory_space<vmem>>, vector<8x128xf32>,
    %54 = arith.index_cast %15 : i32 to index
    %c0_25 = arith.constant 0 : index
    %55 = vector.load %arg6[%54, %c0_25] : memref<64x128xf32, #tpu.memory_space<vmem>>, vector<8x128xf32>
    tpu.vector_store %arg6[%54, %c0_25], %52 {strides = array<i32>} : memref<64x128xf32, #tpu.memory_space<vmem>>, vector<8x128xf32>,
    %c1_i32 = arith.constant 1 : i32
    %c0_26 = arith.constant 0 : index
    %c0_27 = arith.constant 0 : index
    %56 = vector.load %arg8[%c0_26, %c0_27] : memref<8x128xf32, #tpu.memory_space<vmem>>, vector<8x128xf32>
    %c8_i32_28 = arith.constant 8 : i32
    %57 = arith.muli %c1_i32, %c8_i32_28 : i32
    %58 = tpu.assume_multiple %57, 8 : i32
    %59 = arith.index_cast %58 : i32 to index
    %c0_29 = arith.constant 0 : index
    %60 = vector.load %arg7[%59, %c0_29] : memref<64x384xf32, #tpu.memory_space<vmem>>, vector<8x384xf32>
    %61 = arith.truncf %56 : vector<8x128xf32> to vector<8x128xbf16>
    %cst_30 = arith.constant dense<0.000000e+00> : vector<8x384xf32>
    %62 = tpu.matmul %61, %10, %cst_30 {dimension_numbers = #tpu.dot_dimension_numbers<[1], [0], [0], [1], [0, 0, 1, 1], [], []>} : vector<8x128xbf16>, vector<128x384xbf16>, vector<8x384xf32> -> vector<8x384xf32>
    %63 = vector.broadcast %11 : vector<1x384xf32> to vector<8x384xf32>
    %64 = arith.addf %62, %63 : vector<8x384xf32>
    %65 = vector.extract_strided_slice %60 {offsets = [0, 0], sizes = [8, 128], strides = [1, 1]} : vector<8x384xf32> to vector<8x128xf32>
    %66 = vector.extract_strided_slice %64 {offsets = [0, 0], sizes = [8, 128], strides = [1, 1]} : vector<8x384xf32> to vector<8x128xf32>
    %67 = arith.addf %65, %66 : vector<8x128xf32>
    %68 = arith.negf %67 : vector<8x128xf32>
    %69 = math.exp %68 : vector<8x128xf32>
    %cst_31 = arith.constant 1.000000e+00 : f32
    %70 = vector.broadcast %cst_31 : f32 to vector<8x128xf32>
    %71 = arith.addf %70, %69 : vector<8x128xf32>
    %72 = arith.divf %70, %71 : vector<8x128xf32>
    %73 = vector.extract_strided_slice %60 {offsets = [0, 128], sizes = [8, 128], strides = [1, 1]} : vector<8x384xf32> to vector<8x128xf32>
    %74 = vector.extract_strided_slice %64 {offsets = [0, 128], sizes = [8, 128], strides = [1, 1]} : vector<8x384xf32> to vector<8x128xf32>
    %75 = arith.addf %73, %74 : vector<8x128xf32>
    %76 = arith.negf %75 : vector<8x128xf32>
    %77 = math.exp %76 : vector<8x128xf32>
    %cst_32 = arith.constant 1.000000e+00 : f32
    %78 = vector.broadcast %cst_32 : f32 to vector<8x128xf32>
    %79 = arith.addf %78, %77 : vector<8x128xf32>
    %80 = arith.divf %78, %79 : vector<8x128xf32>
    %81 = vector.extract_strided_slice %60 {offsets = [0, 256], sizes = [8, 128], strides = [1, 1]} : vector<8x384xf32> to vector<8x128xf32>
    %82 = vector.extract_strided_slice %64 {offsets = [0, 256], sizes = [8, 128], strides = [1, 1]} : vector<8x384xf32> to vector<8x128xf32>
    %83 = arith.mulf %72, %82 : vector<8x128xf32>
    %84 = arith.addf %81, %83 : vector<8x128xf32>
    %85 = math.tanh %84 : vector<8x128xf32>
    %cst_33 = arith.constant 1.000000e+00 : f32
    %86 = vector.broadcast %cst_33 : f32 to vector<8x128xf32>
    %87 = arith.subf %86, %80 : vector<8x128xf32>
    %88 = arith.mulf %87, %85 : vector<8x128xf32>
    %89 = arith.mulf %80, %56 : vector<8x128xf32>
    %90 = arith.addf %88, %89 : vector<8x128xf32>
    %91 = vector.broadcast %c1_i32 : i32 to vector<8x1xi32>
    %92 = arith.cmpi slt, %91, %12 : vector<8x1xi32>
    %93 = vector.shape_cast %92 : vector<8x1xi1> to vector<8x1xi1>
    %94 = vector.broadcast %93 : vector<8x1xi1> to vector<8x128xi1>
    %95 = arith.select %94, %90, %56 : vector<8x128xi1>, vector<8x128xf32>
    %c0_34 = arith.constant 0 : index
    %c0_35 = arith.constant 0 : index
    %96 = vector.load %arg8[%c0_34, %c0_35] : memref<8x128xf32, #tpu.memory_space<vmem>>, vector<8x128xf32>
    tpu.vector_store %arg8[%c0_34, %c0_35], %95 {strides = array<i32>} : memref<8x128xf32, #tpu.memory_space<vmem>>, vector<8x128xf32>,
    %97 = arith.index_cast %58 : i32 to index
    %c0_36 = arith.constant 0 : index
    %98 = vector.load %arg6[%97, %c0_36] : memref<64x128xf32, #tpu.memory_space<vmem>>, vector<8x128xf32>
    tpu.vector_store %arg6[%97, %c0_36], %95 {strides = array<i32>} : memref<64x128xf32, #tpu.memory_space<vmem>>, vector<8x128xf32>,
    %c2_i32 = arith.constant 2 : i32
    %c0_37 = arith.constant 0 : index
    %c0_38 = arith.constant 0 : index
    %99 = vector.load %arg8[%c0_37, %c0_38] : memref<8x128xf32, #tpu.memory_space<vmem>>, vector<8x128xf32>
    %c8_i32_39 = arith.constant 8 : i32
    %100 = arith.muli %c2_i32, %c8_i32_39 : i32
    %101 = tpu.assume_multiple %100, 8 : i32
    %102 = arith.index_cast %101 : i32 to index
    %c0_40 = arith.constant 0 : index
    %103 = vector.load %arg7[%102, %c0_40] : memref<64x384xf32, #tpu.memory_space<vmem>>, vector<8x384xf32>
    %104 = arith.truncf %99 : vector<8x128xf32> to vector<8x128xbf16>
    %cst_41 = arith.constant dense<0.000000e+00> : vector<8x384xf32>
    %105 = tpu.matmul %104, %10, %cst_41 {dimension_numbers = #tpu.dot_dimension_numbers<[1], [0], [0], [1], [0, 0, 1, 1], [], []>} : vector<8x128xbf16>, vector<128x384xbf16>, vector<8x384xf32> -> vector<8x384xf32>
    %106 = vector.broadcast %11 : vector<1x384xf32> to vector<8x384xf32>
    %107 = arith.addf %105, %106 : vector<8x384xf32>
    %108 = vector.extract_strided_slice %103 {offsets = [0, 0], sizes = [8, 128], strides = [1, 1]} : vector<8x384xf32> to vector<8x128xf32>
    %109 = vector.extract_strided_slice %107 {offsets = [0, 0], sizes = [8, 128], strides = [1, 1]} : vector<8x384xf32> to vector<8x128xf32>
    %110 = arith.addf %108, %109 : vector<8x128xf32>
    %111 = arith.negf %110 : vector<8x128xf32>
    %112 = math.exp %111 : vector<8x128xf32>
    %cst_42 = arith.constant 1.000000e+00 : f32
    %113 = vector.broadcast %cst_42 : f32 to vector<8x128xf32>
    %114 = arith.addf %113, %112 : vector<8x128xf32>
    %115 = arith.divf %113, %114 : vector<8x128xf32>
    %116 = vector.extract_strided_slice %103 {offsets = [0, 128], sizes = [8, 128], strides = [1, 1]} : vector<8x384xf32> to vector<8x128xf32>
    %117 = vector.extract_strided_slice %107 {offsets = [0, 128], sizes = [8, 128], strides = [1, 1]} : vector<8x384xf32> to vector<8x128xf32>
    %118 = arith.addf %116, %117 : vector<8x128xf32>
    %119 = arith.negf %118 : vector<8x128xf32>
    %120 = math.exp %119 : vector<8x128xf32>
    %cst_43 = arith.constant 1.000000e+00 : f32
    %121 = vector.broadcast %cst_43 : f32 to vector<8x128xf32>
    %122 = arith.addf %121, %120 : vector<8x128xf32>
    %123 = arith.divf %121, %122 : vector<8x128xf32>
    %124 = vector.extract_strided_slice %103 {offsets = [0, 256], sizes = [8, 128], strides = [1, 1]} : vector<8x384xf32> to vector<8x128xf32>
    %125 = vector.extract_strided_slice %107 {offsets = [0, 256], sizes = [8, 128], strides = [1, 1]} : vector<8x384xf32> to vector<8x128xf32>
    %126 = arith.mulf %115, %125 : vector<8x128xf32>
    %127 = arith.addf %124, %126 : vector<8x128xf32>
    %128 = math.tanh %127 : vector<8x128xf32>
    %cst_44 = arith.constant 1.000000e+00 : f32
    %129 = vector.broadcast %cst_44 : f32 to vector<8x128xf32>
    %130 = arith.subf %129, %123 : vector<8x128xf32>
    %131 = arith.mulf %130, %128 : vector<8x128xf32>
    %132 = arith.mulf %123, %99 : vector<8x128xf32>
    %133 = arith.addf %131, %132 : vector<8x128xf32>
    %134 = vector.broadcast %c2_i32 : i32 to vector<8x1xi32>
    %135 = arith.cmpi slt, %134, %12 : vector<8x1xi32>
    %136 = vector.shape_cast %135 : vector<8x1xi1> to vector<8x1xi1>
    %137 = vector.broadcast %136 : vector<8x1xi1> to vector<8x128xi1>
    %138 = arith.select %137, %133, %99 : vector<8x128xi1>, vector<8x128xf32>
    %c0_45 = arith.constant 0 : index
    %c0_46 = arith.constant 0 : index
    %139 = vector.load %arg8[%c0_45, %c0_46] : memref<8x128xf32, #tpu.memory_space<vmem>>, vector<8x128xf32>
    tpu.vector_store %arg8[%c0_45, %c0_46], %138 {strides = array<i32>} : memref<8x128xf32, #tpu.memory_space<vmem>>, vector<8x128xf32>,
    %140 = arith.index_cast %101 : i32 to index
    %c0_47 = arith.constant 0 : index
    %141 = vector.load %arg6[%140, %c0_47] : memref<64x128xf32, #tpu.memory_space<vmem>>, vector<8x128xf32>
    tpu.vector_store %arg6[%140, %c0_47], %138 {strides = array<i32>} : memref<64x128xf32, #tpu.memory_space<vmem>>, vector<8x128xf32>,
    %c3_i32 = arith.constant 3 : i32
    %c0_48 = arith.constant 0 : index
    %c0_49 = arith.constant 0 : index
    %142 = vector.load %arg8[%c0_48, %c0_49] : memref<8x128xf32, #tpu.memory_space<vmem>>, vector<8x128xf32>
    %c8_i32_50 = arith.constant 8 : i32
    %143 = arith.muli %c3_i32, %c8_i32_50 : i32
    %144 = tpu.assume_multiple %143, 8 : i32
    %145 = arith.index_cast %144 : i32 to index
    %c0_51 = arith.constant 0 : index
    %146 = vector.load %arg7[%145, %c0_51] : memref<64x384xf32, #tpu.memory_space<vmem>>, vector<8x384xf32>
    %147 = arith.truncf %142 : vector<8x128xf32> to vector<8x128xbf16>
    %cst_52 = arith.constant dense<0.000000e+00> : vector<8x384xf32>
    %148 = tpu.matmul %147, %10, %cst_52 {dimension_numbers = #tpu.dot_dimension_numbers<[1], [0], [0], [1], [0, 0, 1, 1], [], []>} : vector<8x128xbf16>, vector<128x384xbf16>, vector<8x384xf32> -> vector<8x384xf32>
    %149 = vector.broadcast %11 : vector<1x384xf32> to vector<8x384xf32>
    %150 = arith.addf %148, %149 : vector<8x384xf32>
    %151 = vector.extract_strided_slice %146 {offsets = [0, 0], sizes = [8, 128], strides = [1, 1]} : vector<8x384xf32> to vector<8x128xf32>
    %152 = vector.extract_strided_slice %150 {offsets = [0, 0], sizes = [8, 128], strides = [1, 1]} : vector<8x384xf32> to vector<8x128xf32>
    %153 = arith.addf %151, %152 : vector<8x128xf32>
    %154 = arith.negf %153 : vector<8x128xf32>
    %155 = math.exp %154 : vector<8x128xf32>
    %cst_53 = arith.constant 1.000000e+00 : f32
    %156 = vector.broadcast %cst_53 : f32 to vector<8x128xf32>
    %157 = arith.addf %156, %155 : vector<8x128xf32>
    %158 = arith.divf %156, %157 : vector<8x128xf32>
    %159 = vector.extract_strided_slice %146 {offsets = [0, 128], sizes = [8, 128], strides = [1, 1]} : vector<8x384xf32> to vector<8x128xf32>
    %160 = vector.extract_strided_slice %150 {offsets = [0, 128], sizes = [8, 128], strides = [1, 1]} : vector<8x384xf32> to vector<8x128xf32>
    %161 = arith.addf %159, %160 : vector<8x128xf32>
    %162 = arith.negf %161 : vector<8x128xf32>
    %163 = math.exp %162 : vector<8x128xf32>
    %cst_54 = arith.constant 1.000000e+00 : f32
    %164 = vector.broadcast %cst_54 : f32 to vector<8x128xf32>
    %165 = arith.addf %164, %163 : vector<8x128xf32>
    %166 = arith.divf %164, %165 : vector<8x128xf32>
    %167 = vector.extract_strided_slice %146 {offsets = [0, 256], sizes = [8, 128], strides = [1, 1]} : vector<8x384xf32> to vector<8x128xf32>
    %168 = vector.extract_strided_slice %150 {offsets = [0, 256], sizes = [8, 128], strides = [1, 1]} : vector<8x384xf32> to vector<8x128xf32>
    %169 = arith.mulf %158, %168 : vector<8x128xf32>
    %170 = arith.addf %167, %169 : vector<8x128xf32>
    %171 = math.tanh %170 : vector<8x128xf32>
    %cst_55 = arith.constant 1.000000e+00 : f32
    %172 = vector.broadcast %cst_55 : f32 to vector<8x128xf32>
    %173 = arith.subf %172, %166 : vector<8x128xf32>
    %174 = arith.mulf %173, %171 : vector<8x128xf32>
    %175 = arith.mulf %166, %142 : vector<8x128xf32>
    %176 = arith.addf %174, %175 : vector<8x128xf32>
    %177 = vector.broadcast %c3_i32 : i32 to vector<8x1xi32>
    %178 = arith.cmpi slt, %177, %12 : vector<8x1xi32>
    %179 = vector.shape_cast %178 : vector<8x1xi1> to vector<8x1xi1>
    %180 = vector.broadcast %179 : vector<8x1xi1> to vector<8x128xi1>
    %181 = arith.select %180, %176, %142 : vector<8x128xi1>, vector<8x128xf32>
    %c0_56 = arith.constant 0 : index
    %c0_57 = arith.constant 0 : index
    %182 = vector.load %arg8[%c0_56, %c0_57] : memref<8x128xf32, #tpu.memory_space<vmem>>, vector<8x128xf32>
    tpu.vector_store %arg8[%c0_56, %c0_57], %181 {strides = array<i32>} : memref<8x128xf32, #tpu.memory_space<vmem>>, vector<8x128xf32>,
    %183 = arith.index_cast %144 : i32 to index
    %c0_58 = arith.constant 0 : index
    %184 = vector.load %arg6[%183, %c0_58] : memref<64x128xf32, #tpu.memory_space<vmem>>, vector<8x128xf32>
    tpu.vector_store %arg6[%183, %c0_58], %181 {strides = array<i32>} : memref<64x128xf32, #tpu.memory_space<vmem>>, vector<8x128xf32>,
    %c4_i32 = arith.constant 4 : i32
    %c0_59 = arith.constant 0 : index
    %c0_60 = arith.constant 0 : index
    %185 = vector.load %arg8[%c0_59, %c0_60] : memref<8x128xf32, #tpu.memory_space<vmem>>, vector<8x128xf32>
    %c8_i32_61 = arith.constant 8 : i32
    %186 = arith.muli %c4_i32, %c8_i32_61 : i32
    %187 = tpu.assume_multiple %186, 8 : i32
    %188 = arith.index_cast %187 : i32 to index
    %c0_62 = arith.constant 0 : index
    %189 = vector.load %arg7[%188, %c0_62] : memref<64x384xf32, #tpu.memory_space<vmem>>, vector<8x384xf32>
    %190 = arith.truncf %185 : vector<8x128xf32> to vector<8x128xbf16>
    %cst_63 = arith.constant dense<0.000000e+00> : vector<8x384xf32>
    %191 = tpu.matmul %190, %10, %cst_63 {dimension_numbers = #tpu.dot_dimension_numbers<[1], [0], [0], [1], [0, 0, 1, 1], [], []>} : vector<8x128xbf16>, vector<128x384xbf16>, vector<8x384xf32> -> vector<8x384xf32>
    %192 = vector.broadcast %11 : vector<1x384xf32> to vector<8x384xf32>
    %193 = arith.addf %191, %192 : vector<8x384xf32>
    %194 = vector.extract_strided_slice %189 {offsets = [0, 0], sizes = [8, 128], strides = [1, 1]} : vector<8x384xf32> to vector<8x128xf32>
    %195 = vector.extract_strided_slice %193 {offsets = [0, 0], sizes = [8, 128], strides = [1, 1]} : vector<8x384xf32> to vector<8x128xf32>
    %196 = arith.addf %194, %195 : vector<8x128xf32>
    %197 = arith.negf %196 : vector<8x128xf32>
    %198 = math.exp %197 : vector<8x128xf32>
    %cst_64 = arith.constant 1.000000e+00 : f32
    %199 = vector.broadcast %cst_64 : f32 to vector<8x128xf32>
    %200 = arith.addf %199, %198 : vector<8x128xf32>
    %201 = arith.divf %199, %200 : vector<8x128xf32>
    %202 = vector.extract_strided_slice %189 {offsets = [0, 128], sizes = [8, 128], strides = [1, 1]} : vector<8x384xf32> to vector<8x128xf32>
    %203 = vector.extract_strided_slice %193 {offsets = [0, 128], sizes = [8, 128], strides = [1, 1]} : vector<8x384xf32> to vector<8x128xf32>
    %204 = arith.addf %202, %203 : vector<8x128xf32>
    %205 = arith.negf %204 : vector<8x128xf32>
    %206 = math.exp %205 : vector<8x128xf32>
    %cst_65 = arith.constant 1.000000e+00 : f32
    %207 = vector.broadcast %cst_65 : f32 to vector<8x128xf32>
    %208 = arith.addf %207, %206 : vector<8x128xf32>
    %209 = arith.divf %207, %208 : vector<8x128xf32>
    %210 = vector.extract_strided_slice %189 {offsets = [0, 256], sizes = [8, 128], strides = [1, 1]} : vector<8x384xf32> to vector<8x128xf32>
    %211 = vector.extract_strided_slice %193 {offsets = [0, 256], sizes = [8, 128], strides = [1, 1]} : vector<8x384xf32> to vector<8x128xf32>
    %212 = arith.mulf %201, %211 : vector<8x128xf32>
    %213 = arith.addf %210, %212 : vector<8x128xf32>
    %214 = math.tanh %213 : vector<8x128xf32>
    %cst_66 = arith.constant 1.000000e+00 : f32
    %215 = vector.broadcast %cst_66 : f32 to vector<8x128xf32>
    %216 = arith.subf %215, %209 : vector<8x128xf32>
    %217 = arith.mulf %216, %214 : vector<8x128xf32>
    %218 = arith.mulf %209, %185 : vector<8x128xf32>
    %219 = arith.addf %217, %218 : vector<8x128xf32>
    %220 = vector.broadcast %c4_i32 : i32 to vector<8x1xi32>
    %221 = arith.cmpi slt, %220, %12 : vector<8x1xi32>
    %222 = vector.shape_cast %221 : vector<8x1xi1> to vector<8x1xi1>
    %223 = vector.broadcast %222 : vector<8x1xi1> to vector<8x128xi1>
    %224 = arith.select %223, %219, %185 : vector<8x128xi1>, vector<8x128xf32>
    %c0_67 = arith.constant 0 : index
    %c0_68 = arith.constant 0 : index
    %225 = vector.load %arg8[%c0_67, %c0_68] : memref<8x128xf32, #tpu.memory_space<vmem>>, vector<8x128xf32>
    tpu.vector_store %arg8[%c0_67, %c0_68], %224 {strides = array<i32>} : memref<8x128xf32, #tpu.memory_space<vmem>>, vector<8x128xf32>,
    %226 = arith.index_cast %187 : i32 to index
    %c0_69 = arith.constant 0 : index
    %227 = vector.load %arg6[%226, %c0_69] : memref<64x128xf32, #tpu.memory_space<vmem>>, vector<8x128xf32>
    tpu.vector_store %arg6[%226, %c0_69], %224 {strides = array<i32>} : memref<64x128xf32, #tpu.memory_space<vmem>>, vector<8x128xf32>,
    %c5_i32 = arith.constant 5 : i32
    %c0_70 = arith.constant 0 : index
    %c0_71 = arith.constant 0 : index
    %228 = vector.load %arg8[%c0_70, %c0_71] : memref<8x128xf32, #tpu.memory_space<vmem>>, vector<8x128xf32>
    %c8_i32_72 = arith.constant 8 : i32
    %229 = arith.muli %c5_i32, %c8_i32_72 : i32
    %230 = tpu.assume_multiple %229, 8 : i32
    %231 = arith.index_cast %230 : i32 to index
    %c0_73 = arith.constant 0 : index
    %232 = vector.load %arg7[%231, %c0_73] : memref<64x384xf32, #tpu.memory_space<vmem>>, vector<8x384xf32>
    %233 = arith.truncf %228 : vector<8x128xf32> to vector<8x128xbf16>
    %cst_74 = arith.constant dense<0.000000e+00> : vector<8x384xf32>
    %234 = tpu.matmul %233, %10, %cst_74 {dimension_numbers = #tpu.dot_dimension_numbers<[1], [0], [0], [1], [0, 0, 1, 1], [], []>} : vector<8x128xbf16>, vector<128x384xbf16>, vector<8x384xf32> -> vector<8x384xf32>
    %235 = vector.broadcast %11 : vector<1x384xf32> to vector<8x384xf32>
    %236 = arith.addf %234, %235 : vector<8x384xf32>
    %237 = vector.extract_strided_slice %232 {offsets = [0, 0], sizes = [8, 128], strides = [1, 1]} : vector<8x384xf32> to vector<8x128xf32>
    %238 = vector.extract_strided_slice %236 {offsets = [0, 0], sizes = [8, 128], strides = [1, 1]} : vector<8x384xf32> to vector<8x128xf32>
    %239 = arith.addf %237, %238 : vector<8x128xf32>
    %240 = arith.negf %239 : vector<8x128xf32>
    %241 = math.exp %240 : vector<8x128xf32>
    %cst_75 = arith.constant 1.000000e+00 : f32
    %242 = vector.broadcast %cst_75 : f32 to vector<8x128xf32>
    %243 = arith.addf %242, %241 : vector<8x128xf32>
    %244 = arith.divf %242, %243 : vector<8x128xf32>
    %245 = vector.extract_strided_slice %232 {offsets = [0, 128], sizes = [8, 128], strides = [1, 1]} : vector<8x384xf32> to vector<8x128xf32>
    %246 = vector.extract_strided_slice %236 {offsets = [0, 128], sizes = [8, 128], strides = [1, 1]} : vector<8x384xf32> to vector<8x128xf32>
    %247 = arith.addf %245, %246 : vector<8x128xf32>
    %248 = arith.negf %247 : vector<8x128xf32>
    %249 = math.exp %248 : vector<8x128xf32>
    %cst_76 = arith.constant 1.000000e+00 : f32
    %250 = vector.broadcast %cst_76 : f32 to vector<8x128xf32>
    %251 = arith.addf %250, %249 : vector<8x128xf32>
    %252 = arith.divf %250, %251 : vector<8x128xf32>
    %253 = vector.extract_strided_slice %232 {offsets = [0, 256], sizes = [8, 128], strides = [1, 1]} : vector<8x384xf32> to vector<8x128xf32>
    %254 = vector.extract_strided_slice %236 {offsets = [0, 256], sizes = [8, 128], strides = [1, 1]} : vector<8x384xf32> to vector<8x128xf32>
    %255 = arith.mulf %244, %254 : vector<8x128xf32>
    %256 = arith.addf %253, %255 : vector<8x128xf32>
    %257 = math.tanh %256 : vector<8x128xf32>
    %cst_77 = arith.constant 1.000000e+00 : f32
    %258 = vector.broadcast %cst_77 : f32 to vector<8x128xf32>
    %259 = arith.subf %258, %252 : vector<8x128xf32>
    %260 = arith.mulf %259, %257 : vector<8x128xf32>
    %261 = arith.mulf %252, %228 : vector<8x128xf32>
    %262 = arith.addf %260, %261 : vector<8x128xf32>
    %263 = vector.broadcast %c5_i32 : i32 to vector<8x1xi32>
    %264 = arith.cmpi slt, %263, %12 : vector<8x1xi32>
    %265 = vector.shape_cast %264 : vector<8x1xi1> to vector<8x1xi1>
    %266 = vector.broadcast %265 : vector<8x1xi1> to vector<8x128xi1>
    %267 = arith.select %266, %262, %228 : vector<8x128xi1>, vector<8x128xf32>
    %c0_78 = arith.constant 0 : index
    %c0_79 = arith.constant 0 : index
    %268 = vector.load %arg8[%c0_78, %c0_79] : memref<8x128xf32, #tpu.memory_space<vmem>>, vector<8x128xf32>
    tpu.vector_store %arg8[%c0_78, %c0_79], %267 {strides = array<i32>} : memref<8x128xf32, #tpu.memory_space<vmem>>, vector<8x128xf32>,
    %269 = arith.index_cast %230 : i32 to index
    %c0_80 = arith.constant 0 : index
    %270 = vector.load %arg6[%269, %c0_80] : memref<64x128xf32, #tpu.memory_space<vmem>>, vector<8x128xf32>
    tpu.vector_store %arg6[%269, %c0_80], %267 {strides = array<i32>} : memref<64x128xf32, #tpu.memory_space<vmem>>, vector<8x128xf32>,
    %c6_i32 = arith.constant 6 : i32
    %c0_81 = arith.constant 0 : index
    %c0_82 = arith.constant 0 : index
    %271 = vector.load %arg8[%c0_81, %c0_82] : memref<8x128xf32, #tpu.memory_space<vmem>>, vector<8x128xf32>
    %c8_i32_83 = arith.constant 8 : i32
    %272 = arith.muli %c6_i32, %c8_i32_83 : i32
    %273 = tpu.assume_multiple %272, 8 : i32
    %274 = arith.index_cast %273 : i32 to index
    %c0_84 = arith.constant 0 : index
    %275 = vector.load %arg7[%274, %c0_84] : memref<64x384xf32, #tpu.memory_space<vmem>>, vector<8x384xf32>
    %276 = arith.truncf %271 : vector<8x128xf32> to vector<8x128xbf16>
    %cst_85 = arith.constant dense<0.000000e+00> : vector<8x384xf32>
    %277 = tpu.matmul %276, %10, %cst_85 {dimension_numbers = #tpu.dot_dimension_numbers<[1], [0], [0], [1], [0, 0, 1, 1], [], []>} : vector<8x128xbf16>, vector<128x384xbf16>, vector<8x384xf32> -> vector<8x384xf32>
    %278 = vector.broadcast %11 : vector<1x384xf32> to vector<8x384xf32>
    %279 = arith.addf %277, %278 : vector<8x384xf32>
    %280 = vector.extract_strided_slice %275 {offsets = [0, 0], sizes = [8, 128], strides = [1, 1]} : vector<8x384xf32> to vector<8x128xf32>
    %281 = vector.extract_strided_slice %279 {offsets = [0, 0], sizes = [8, 128], strides = [1, 1]} : vector<8x384xf32> to vector<8x128xf32>
    %282 = arith.addf %280, %281 : vector<8x128xf32>
    %283 = arith.negf %282 : vector<8x128xf32>
    %284 = math.exp %283 : vector<8x128xf32>
    %cst_86 = arith.constant 1.000000e+00 : f32
    %285 = vector.broadcast %cst_86 : f32 to vector<8x128xf32>
    %286 = arith.addf %285, %284 : vector<8x128xf32>
    %287 = arith.divf %285, %286 : vector<8x128xf32>
    %288 = vector.extract_strided_slice %275 {offsets = [0, 128], sizes = [8, 128], strides = [1, 1]} : vector<8x384xf32> to vector<8x128xf32>
    %289 = vector.extract_strided_slice %279 {offsets = [0, 128], sizes = [8, 128], strides = [1, 1]} : vector<8x384xf32> to vector<8x128xf32>
    %290 = arith.addf %288, %289 : vector<8x128xf32>
    %291 = arith.negf %290 : vector<8x128xf32>
    %292 = math.exp %291 : vector<8x128xf32>
    %cst_87 = arith.constant 1.000000e+00 : f32
    %293 = vector.broadcast %cst_87 : f32 to vector<8x128xf32>
    %294 = arith.addf %293, %292 : vector<8x128xf32>
    %295 = arith.divf %293, %294 : vector<8x128xf32>
    %296 = vector.extract_strided_slice %275 {offsets = [0, 256], sizes = [8, 128], strides = [1, 1]} : vector<8x384xf32> to vector<8x128xf32>
    %297 = vector.extract_strided_slice %279 {offsets = [0, 256], sizes = [8, 128], strides = [1, 1]} : vector<8x384xf32> to vector<8x128xf32>
    %298 = arith.mulf %287, %297 : vector<8x128xf32>
    %299 = arith.addf %296, %298 : vector<8x128xf32>
    %300 = math.tanh %299 : vector<8x128xf32>
    %cst_88 = arith.constant 1.000000e+00 : f32
    %301 = vector.broadcast %cst_88 : f32 to vector<8x128xf32>
    %302 = arith.subf %301, %295 : vector<8x128xf32>
    %303 = arith.mulf %302, %300 : vector<8x128xf32>
    %304 = arith.mulf %295, %271 : vector<8x128xf32>
    %305 = arith.addf %303, %304 : vector<8x128xf32>
    %306 = vector.broadcast %c6_i32 : i32 to vector<8x1xi32>
    %307 = arith.cmpi slt, %306, %12 : vector<8x1xi32>
    %308 = vector.shape_cast %307 : vector<8x1xi1> to vector<8x1xi1>
    %309 = vector.broadcast %308 : vector<8x1xi1> to vector<8x128xi1>
    %310 = arith.select %309, %305, %271 : vector<8x128xi1>, vector<8x128xf32>
    %c0_89 = arith.constant 0 : index
    %c0_90 = arith.constant 0 : index
    %311 = vector.load %arg8[%c0_89, %c0_90] : memref<8x128xf32, #tpu.memory_space<vmem>>, vector<8x128xf32>
    tpu.vector_store %arg8[%c0_89, %c0_90], %310 {strides = array<i32>} : memref<8x128xf32, #tpu.memory_space<vmem>>, vector<8x128xf32>,
    %312 = arith.index_cast %273 : i32 to index
    %c0_91 = arith.constant 0 : index
    %313 = vector.load %arg6[%312, %c0_91] : memref<64x128xf32, #tpu.memory_space<vmem>>, vector<8x128xf32>
    tpu.vector_store %arg6[%312, %c0_91], %310 {strides = array<i32>} : memref<64x128xf32, #tpu.memory_space<vmem>>, vector<8x128xf32>,
    %c7_i32 = arith.constant 7 : i32
    %c0_92 = arith.constant 0 : index
    %c0_93 = arith.constant 0 : index
    %314 = vector.load %arg8[%c0_92, %c0_93] : memref<8x128xf32, #tpu.memory_space<vmem>>, vector<8x128xf32>
    %c8_i32_94 = arith.constant 8 : i32
    %315 = arith.muli %c7_i32, %c8_i32_94 : i32
    %316 = tpu.assume_multiple %315, 8 : i32
    %317 = arith.index_cast %316 : i32 to index
    %c0_95 = arith.constant 0 : index
    %318 = vector.load %arg7[%317, %c0_95] : memref<64x384xf32, #tpu.memory_space<vmem>>, vector<8x384xf32>
    %319 = arith.truncf %314 : vector<8x128xf32> to vector<8x128xbf16>
    %cst_96 = arith.constant dense<0.000000e+00> : vector<8x384xf32>
    %320 = tpu.matmul %319, %10, %cst_96 {dimension_numbers = #tpu.dot_dimension_numbers<[1], [0], [0], [1], [0, 0, 1, 1], [], []>} : vector<8x128xbf16>, vector<128x384xbf16>, vector<8x384xf32> -> vector<8x384xf32>
    %321 = vector.broadcast %11 : vector<1x384xf32> to vector<8x384xf32>
    %322 = arith.addf %320, %321 : vector<8x384xf32>
    %323 = vector.extract_strided_slice %318 {offsets = [0, 0], sizes = [8, 128], strides = [1, 1]} : vector<8x384xf32> to vector<8x128xf32>
    %324 = vector.extract_strided_slice %322 {offsets = [0, 0], sizes = [8, 128], strides = [1, 1]} : vector<8x384xf32> to vector<8x128xf32>
    %325 = arith.addf %323, %324 : vector<8x128xf32>
    %326 = arith.negf %325 : vector<8x128xf32>
    %327 = math.exp %326 : vector<8x128xf32>
    %cst_97 = arith.constant 1.000000e+00 : f32
    %328 = vector.broadcast %cst_97 : f32 to vector<8x128xf32>
    %329 = arith.addf %328, %327 : vector<8x128xf32>
    %330 = arith.divf %328, %329 : vector<8x128xf32>
    %331 = vector.extract_strided_slice %318 {offsets = [0, 128], sizes = [8, 128], strides = [1, 1]} : vector<8x384xf32> to vector<8x128xf32>
    %332 = vector.extract_strided_slice %322 {offsets = [0, 128], sizes = [8, 128], strides = [1, 1]} : vector<8x384xf32> to vector<8x128xf32>
    %333 = arith.addf %331, %332 : vector<8x128xf32>
    %334 = arith.negf %333 : vector<8x128xf32>
    %335 = math.exp %334 : vector<8x128xf32>
    %cst_98 = arith.constant 1.000000e+00 : f32
    %336 = vector.broadcast %cst_98 : f32 to vector<8x128xf32>
    %337 = arith.addf %336, %335 : vector<8x128xf32>
    %338 = arith.divf %336, %337 : vector<8x128xf32>
    %339 = vector.extract_strided_slice %318 {offsets = [0, 256], sizes = [8, 128], strides = [1, 1]} : vector<8x384xf32> to vector<8x128xf32>
    %340 = vector.extract_strided_slice %322 {offsets = [0, 256], sizes = [8, 128], strides = [1, 1]} : vector<8x384xf32> to vector<8x128xf32>
    %341 = arith.mulf %330, %340 : vector<8x128xf32>
    %342 = arith.addf %339, %341 : vector<8x128xf32>
    %343 = math.tanh %342 : vector<8x128xf32>
    %cst_99 = arith.constant 1.000000e+00 : f32
    %344 = vector.broadcast %cst_99 : f32 to vector<8x128xf32>
    %345 = arith.subf %344, %338 : vector<8x128xf32>
    %346 = arith.mulf %345, %343 : vector<8x128xf32>
    %347 = arith.mulf %338, %314 : vector<8x128xf32>
    %348 = arith.addf %346, %347 : vector<8x128xf32>
    %349 = vector.broadcast %c7_i32 : i32 to vector<8x1xi32>
    %350 = arith.cmpi slt, %349, %12 : vector<8x1xi32>
    %351 = vector.shape_cast %350 : vector<8x1xi1> to vector<8x1xi1>
    %352 = vector.broadcast %351 : vector<8x1xi1> to vector<8x128xi1>
    %353 = arith.select %352, %348, %314 : vector<8x128xi1>, vector<8x128xf32>
    %c0_100 = arith.constant 0 : index
    %c0_101 = arith.constant 0 : index
    %354 = vector.load %arg8[%c0_100, %c0_101] : memref<8x128xf32, #tpu.memory_space<vmem>>, vector<8x128xf32>
    tpu.vector_store %arg8[%c0_100, %c0_101], %353 {strides = array<i32>} : memref<8x128xf32, #tpu.memory_space<vmem>>, vector<8x128xf32>,
    %355 = arith.index_cast %316 : i32 to index
    %c0_102 = arith.constant 0 : index
    %356 = vector.load %arg6[%355, %c0_102] : memref<64x128xf32, #tpu.memory_space<vmem>>, vector<8x128xf32>
    tpu.vector_store %arg6[%355, %c0_102], %353 {strides = array<i32>} : memref<64x128xf32, #tpu.memory_space<vmem>>, vector<8x128xf32>,
    %c8_i32_103 = arith.constant 8 : i32
    return
  }
}

</mosaic_0001>

<llo_original>
// kernel: tpu_custom_call.1
$region0: #{tpu_custom_call.1}
  #allocation0 [shape = 'u32[]', space=smem, size = 0x4, offset = 0x4, fixed_abs, tag = 'smem constant byte address 0x4 - core index']
  #allocation1 [shape = 'u32[72,128]{1,0:T(1,128)}', space=vmem, size = 0x9000, scoped, tag = 'internal scratch']
  #allocation2 [shape = 'f32[64,384]{1,0:T(8,128)}', space=vmem, size = 0x18000, scoped, tag = 'scratch operand']
  #allocation3 [shape = 'f32[8,128]{1,0:T(8,128)}', space=vmem, size = 0x1000, scoped, tag = 'scratch operand']
  %s0 = inlined_call_operand.hbm [shape: f32[64,128], index: 0, kind: input, shape index: {}]
  %s1 = inlined_call_operand.vmem [shape: s32[8,1], index: 1, kind: input, shape index: {}]
  %s2 = inlined_call_operand.hbm [shape: bf16[128,384], index: 2, kind: input, shape index: {}]
  %s3 = inlined_call_operand.hbm [shape: bf16[128,384], index: 3, kind: input, shape index: {}]
  %s4 = inlined_call_operand.vmem [shape: f32[1,384], index: 4, kind: input, shape index: {}]
  %s5 = inlined_call_operand.vmem [shape: f32[1,384], index: 5, kind: input, shape index: {}]
  %s6 = inlined_call_operand.hbm [shape: f32[64,128], index: 6, kind: output, shape index: {}]
  %s7 = sld [smem:[#allocation0]]
  $region46: #{tpu_custom_call.1} parent=0
    _
  %s9 = ssub.s32 1, %s7
  %s10 = scalar_select 0, %s9, %s7
  $region1: #{tpu_custom_call.1} parent=0
    #allocation4 [shape = 'u8[32768]{0}', space=vmem, size = 0x8000, scoped, tag = 'input window, operand 0, single buffered']
    #allocation5 [shape = 's32[1]{0}', space=sflag, size = 0x4, scoped, tag = 'scoped memory for tpu_custom_call.1']
    #allocation6 [shape = 's32[1]{0}', space=sflag, size = 0x4, scoped, tag = 'scoped memory for tpu_custom_call.1']
    #allocation7 [shape = 'u8[98304]{0}', space=vmem, size = 0x18000, scoped, tag = 'input window, operand 2, single buffered']
    #allocation8 [shape = 's32[1]{0}', space=sflag, size = 0x4, scoped, tag = 'scoped memory for tpu_custom_call.1']
    #allocation9 [shape = 'u8[98304]{0}', space=vmem, size = 0x18000, scoped, tag = 'input window, operand 3, single buffered']
    #allocation10 [shape = 'u8[32768]{0}', space=vmem, size = 0x8000, scoped, tag = 'output window, operand 0, single buffered']
    %11 = vsyncpa [#allocation5], 0
    %12 = vsyncpa [#allocation8], 0
    %13 = vsyncpa [#allocation6], 0
    // Predicated region
    $region2: #{tpu_custom_call.1} parent=1 // pred_check
      _
    $region3: #{tpu_custom_call.1} parent=1 // pred_check_branch
      %15 = sbr.rel (0) target = $region5
    $region4: #{tpu_custom_call.1} parent=1 // pred_region
      %17 = vsyncadd [#allocation5], 0
      %s18 = sshll.u32 %s0, 4
      %s19 = int_to_ptr.hbm [resolvable:$true] %s18
      %s20 = sshll.u32 [#allocation4], 4
      %s21 = int_to_ptr.vmem [resolvable:$true] %s20
      %26 = dma.hbm_to_vmem [thread:$0]  %s19, 1024, %s21, [#allocation5], 128, 128, 8
    $region5: #{tpu_custom_call.1} parent=1 // pred_fallthru
      _
    // Predicated region
    $region6: #{tpu_custom_call.1} parent=1 // pred_check
      _
    $region7: #{tpu_custom_call.1} parent=1 // pred_check_branch
      %28 = sbr.rel (0) target = $region9
    $region8: #{tpu_custom_call.1} parent=1 // pred_region
      _
    $region9: #{tpu_custom_call.1} parent=1 // pred_fallthru
      _
    // Predicated region
    $region10: #{tpu_custom_call.1} parent=1 // pred_check
      _
    $region11: #{tpu_custom_call.1} parent=1 // pred_check_branch
      %30 = sbr.rel (0) target = $region13
    $region12: #{tpu_custom_call.1} parent=1 // pred_region
      %32 = vsyncadd [#allocation8], 0
      %s33 = sshll.u32 %s2, 4
      %s34 = int_to_ptr.hbm [resolvable:$true] %s33
      %s35 = sshll.u32 [#allocation7], 4
      %s36 = int_to_ptr.vmem [resolvable:$true] %s35
      %41 = dma.hbm_to_vmem [thread:$0]  %s34, 3072, %s36, [#allocation8], 192, 192, 12
    $region13: #{tpu_custom_call.1} parent=1 // pred_fallthru
      _
    // Predicated region
    $region14: #{tpu_custom_call.1} parent=1 // pred_check
      _
    $region15: #{tpu_custom_call.1} parent=1 // pred_check_branch
      %43 = sbr.rel (0) target = $region17
    $region16: #{tpu_custom_call.1} parent=1 // pred_region
      %45 = vsyncadd [#allocation8], 0
      %s46 = sshll.u32 %s3, 4
      %s47 = int_to_ptr.hbm [resolvable:$true] %s46
      %s48 = sshll.u32 [#allocation9], 4
      %s49 = int_to_ptr.vmem [resolvable:$true] %s48
      %54 = dma.hbm_to_vmem [thread:$0]  %s47, 3072, %s49, [#allocation8], 192, 192, 12
    $region17: #{tpu_custom_call.1} parent=1 // pred_fallthru
      _
    // Predicated region
    $region18: #{tpu_custom_call.1} parent=1 // pred_check
      _
    $region19: #{tpu_custom_call.1} parent=1 // pred_check_branch
      %56 = sbr.rel (0) target = $region21
    $region20: #{tpu_custom_call.1} parent=1 // pred_region
      _
    $region21: #{tpu_custom_call.1} parent=1 // pred_fallthru
      _
    // Predicated region
    $region22: #{tpu_custom_call.1} parent=1 // pred_check
      _
    $region23: #{tpu_custom_call.1} parent=1 // pred_check_branch
      %58 = sbr.rel (0) target = $region25
    $region24: #{tpu_custom_call.1} parent=1 // pred_region
      _
    $region25: #{tpu_custom_call.1} parent=1 // pred_fallthru
      _
    // Predicated region
    $region26: #{tpu_custom_call.1} parent=1 // pred_check
      _
    $region27: #{tpu_custom_call.1} parent=1 // pred_check_branch
      %60 = sbr.rel (0) target = $region29
    $region28: #{tpu_custom_call.1} parent=1 // pred_region
      %62 = dma.done [#allocation5], 1024
    $region29: #{tpu_custom_call.1} parent=1 // pred_fallthru
      _
    // Predicated region
    $region30: #{tpu_custom_call.1} parent=1 // pred_check
      _
    $region31: #{tpu_custom_call.1} parent=1 // pred_check_branch
      %64 = sbr.rel (0) target = $region33
    $region32: #{tpu_custom_call.1} parent=1 // pred_region
      %66 = dma.done [#allocation8], 3072
    $region33: #{tpu_custom_call.1} parent=1 // pred_fallthru
      _
    // Predicated region
    $region34: #{tpu_custom_call.1} parent=1 // pred_check
      _
    $region35: #{tpu_custom_call.1} parent=1 // pred_check_branch
      %68 = sbr.rel (0) target = $region37
    $region36: #{tpu_custom_call.1} parent=1 // pred_region
      %70 = dma.done [#allocation8], 3072
    $region37: #{tpu_custom_call.1} parent=1 // pred_fallthru
      _
    %v71 = vld [vmem:[#allocation4] sm:$0xff]
    %v72 = vld [vmem:[#allocation4 + $0x8] sm:$0xff]
    %v73 = vld [vmem:[#allocation4 + $0x10] sm:$0xff]
    %v74 = vld [vmem:[#allocation4 + $0x18] sm:$0xff]
    %v75 = vld [vmem:[#allocation4 + $0x20] sm:$0xff]
    %v76 = vld [vmem:[#allocation4 + $0x28] sm:$0xff]
    %v77 = vld [vmem:[#allocation4 + $0x30] sm:$0xff]
    %v78 = vld [vmem:[#allocation4 + $0x38] sm:$0xff]
    %v79 = vpack.c.bf16 %v72, %v71
    %v80 = vpack.c.bf16 %v74, %v73
    %v81 = vpack.c.bf16 %v76, %v75
    %v82 = vpack.c.bf16 %v78, %v77
    %v83 = vld [vmem:[#allocation7] sm:$0xff]
    %v84 = vld [vmem:[#allocation7 + $0x8] sm:$0xf]
    %v85 = vld [vmem:[#allocation7 + $0xc] sm:$0xff]
    %v86 = vld [vmem:[#allocation7 + $0x14] sm:$0xf]
    %v87 = vld [vmem:[#allocation7 + $0x18] sm:$0xff]
    %v88 = vld [vmem:[#allocation7 + $0x20] sm:$0xf]
    %v89 = vld [vmem:[#allocation7 + $0x24] sm:$0xff]
    %v90 = vld [vmem:[#allocation7 + $0x2c] sm:$0xf]
    %v91 = vld [vmem:[#allocation7 + $0x30] sm:$0xff]
    %v92 = vld [vmem:[#allocation7 + $0x38] sm:$0xf]
    %v93 = vld [vmem:[#allocation7 + $0x3c] sm:$0xff]
    %v94 = vld [vmem:[#allocation7 + $0x44] sm:$0xf]
    %v95 = vld [vmem:[#allocation7 + $0x48] sm:$0xff]
    %v96 = vld [vmem:[#allocation7 + $0x50] sm:$0xf]
    %v97 = vld [vmem:[#allocation7 + $0x54] sm:$0xff]
    %v98 = vld [vmem:[#allocation7 + $0x5c] sm:$0xf]
    %v99 = vld [vmem:[#allocation7 + $0x60] sm:$0xff]
    %v100 = vld [vmem:[#allocation7 + $0x68] sm:$0xf]
    %v101 = vld [vmem:[#allocation7 + $0x6c] sm:$0xff]
    %v102 = vld [vmem:[#allocation7 + $0x74] sm:$0xf]
    %v103 = vld [vmem:[#allocation7 + $0x78] sm:$0xff]
    %v104 = vld [vmem:[#allocation7 + $0x80] sm:$0xf]
    %v105 = vld [vmem:[#allocation7 + $0x84] sm:$0xff]
    %v106 = vld [vmem:[#allocation7 + $0x8c] sm:$0xf]
    %v107 = vld [vmem:[#allocation7 + $0x90] sm:$0xff]
    %v108 = vld [vmem:[#allocation7 + $0x98] sm:$0xf]
    %v109 = vld [vmem:[#allocation7 + $0x9c] sm:$0xff]
    %v110 = vld [vmem:[#allocation7 + $0xa4] sm:$0xf]
    %v111 = vld [vmem:[#allocation7 + $0xa8] sm:$0xff]
    %v112 = vld [vmem:[#allocation7 + $0xb0] sm:$0xf]
    %v113 = vld [vmem:[#allocation7 + $0xb4] sm:$0xff]
    %v114 = vld [vmem:[#allocation7 + $0xbc] sm:$0xf]
    %v115 = vld [vmem:[%s4] sm:$0x7]
    %v117 = vperm.slane %v115, 0
    %v118 = vperm.slane %v115, 1
    %v119 = vperm.slane %v115, 2
    %v155 = vunpack.c.l.b16 %v83
    %v156 = vunpack.c.h.b16 %v83
    %v157 = vunpack.c.l.b16 %v84
    %v158 = vunpack.c.l.b16 %v85
    %v159 = vunpack.c.h.b16 %v85
    %v160 = vunpack.c.l.b16 %v86
    %v161 = vunpack.c.l.b16 %v87
    %v162 = vunpack.c.h.b16 %v87
    %v163 = vunpack.c.l.b16 %v88
    %v164 = vunpack.c.l.b16 %v89
    %v165 = vunpack.c.h.b16 %v89
    %v166 = vunpack.c.l.b16 %v90
    %v167 = vunpack.c.l.b16 %v91
    %v168 = vunpack.c.h.b16 %v91
    %v169 = vunpack.c.l.b16 %v92
    %v170 = vunpack.c.l.b16 %v93
    %v171 = vunpack.c.h.b16 %v93
    %v172 = vunpack.c.l.b16 %v94
    %v173 = vunpack.c.l.b16 %v95
    %v174 = vunpack.c.h.b16 %v95
    %v175 = vunpack.c.l.b16 %v96
    %v176 = vunpack.c.l.b16 %v97
    %v177 = vunpack.c.h.b16 %v97
    %v178 = vunpack.c.l.b16 %v98
    %v179 = vunpack.c.l.b16 %v99
    %v180 = vunpack.c.h.b16 %v99
    %v181 = vunpack.c.l.b16 %v100
    %v182 = vunpack.c.l.b16 %v101
    %v183 = vunpack.c.h.b16 %v101
    %v184 = vunpack.c.l.b16 %v102
    %v185 = vunpack.c.l.b16 %v103
    %v186 = vunpack.c.h.b16 %v103
    %v187 = vunpack.c.l.b16 %v104
    %v188 = vunpack.c.l.b16 %v105
    %v189 = vunpack.c.h.b16 %v105
    %v190 = vunpack.c.l.b16 %v106
    %v191 = vunpack.c.l.b16 %v107
    %v192 = vunpack.c.h.b16 %v107
    %v193 = vunpack.c.l.b16 %v108
    %v194 = vunpack.c.l.b16 %v109
    %v195 = vunpack.c.h.b16 %v109
    %v196 = vunpack.c.l.b16 %v110
    %v197 = vunpack.c.l.b16 %v111
    %v198 = vunpack.c.h.b16 %v111
    %v199 = vunpack.c.l.b16 %v112
    %v200 = vunpack.c.l.b16 %v113
    %v201 = vunpack.c.h.b16 %v113
    %v202 = vunpack.c.l.b16 %v114
    %v203 = vpack.c.b16 %v158, %v155
    %v204 = vpack.c.b16 %v159, %v156
    %v205 = vpack.c.b16 %v160, %v157
    %v206 = vpack.c.b16 %v164, %v161
    %v207 = vpack.c.b16 %v165, %v162
    %v208 = vpack.c.b16 %v166, %v163
    %v209 = vpack.c.b16 %v170, %v167
    %v210 = vpack.c.b16 %v171, %v168
    %v211 = vpack.c.b16 %v172, %v169
    %v212 = vpack.c.b16 %v176, %v173
    %v213 = vpack.c.b16 %v177, %v174
    %v214 = vpack.c.b16 %v178, %v175
    %v215 = vpack.c.b16 %v182, %v179
    %v216 = vpack.c.b16 %v183, %v180
    %v217 = vpack.c.b16 %v184, %v181
    %v218 = vpack.c.b16 %v188, %v185
    %v219 = vpack.c.b16 %v189, %v186
    %v220 = vpack.c.b16 %v190, %v187
    %v221 = vpack.c.b16 %v194, %v191
    %v222 = vpack.c.b16 %v195, %v192
    %v223 = vpack.c.b16 %v196, %v193
    %v224 = vpack.c.b16 %v200, %v197
    %v225 = vpack.c.b16 %v201, %v198
    %v226 = vpack.c.b16 %v202, %v199
    %251 = vmatpush.bf16.msra.mxu0 %v224
    %252 = vmatpush.bf16.msra.mxu0 %v221
    %253 = vmatpush.bf16.msra.mxu0 %v218
    %254 = vmatpush.bf16.msra.mxu0 %v215
    %255 = vmatpush.bf16.msra.mxu0 %v212
    %256 = vmatpush.bf16.msra.mxu0 %v209
    %257 = vmatpush.bf16.msra.mxu0 %v206
    %258 = vmatpush.bf16.msra.mxu0 %v203
    %259 = vmatmul.bf16.gmra.mxu0 %v79
    %v260 = vpop.f32.mrf.mxu0
    %v261 = vadd.f32 %v117, %v260
    %v262 = vpop.f32.mrf.mxu0
    %v263 = vadd.f32 %v117, %v262
    %264 = vmatmul.bf16.gmra.mxu0 %v80
    %v265 = vpop.f32.mrf.mxu0
    %v266 = vadd.f32 %v117, %v265
    %v267 = vpop.f32.mrf.mxu0
    %v268 = vadd.f32 %v117, %v267
    %269 = vmatmul.bf16.gmra.mxu0 %v81
    %v270 = vpop.f32.mrf.mxu0
    %v271 = vadd.f32 %v117, %v270
    %v272 = vpop.f32.mrf.mxu0
    %v273 = vadd.f32 %v117, %v272
    %274 = vmatmul.bf16.gmra.mxu0 %v82
    %v275 = vpop.f32.mrf.mxu0
    %v276 = vadd.f32 %v117, %v275
    %v277 = vpop.f32.mrf.mxu0
    %v278 = vadd.f32 %v117, %v277
    %279 = vdwg.mxu0
    %280 = vmatpush.bf16.msra.mxu0 %v225
    %281 = vmatpush.bf16.msra.mxu0 %v222
    %282 = vmatpush.bf16.msra.mxu0 %v219
    %283 = vmatpush.bf16.msra.mxu0 %v216
    %284 = vmatpush.bf16.msra.mxu0 %v213
    %285 = vmatpush.bf16.msra.mxu0 %v210
    %286 = vmatpush.bf16.msra.mxu0 %v207
    %287 = vmatpush.bf16.msra.mxu0 %v204
    %288 = vmatmul.bf16.gmra.mxu0 %v79
    %v289 = vpop.f32.mrf.mxu0
    %v290 = vadd.f32 %v118, %v289
    %v291 = vpop.f32.mrf.mxu0
    %v292 = vadd.f32 %v118, %v291
    %293 = vmatmul.bf16.gmra.mxu0 %v80
    %v294 = vpop.f32.mrf.mxu0
    %v295 = vadd.f32 %v118, %v294
    %v296 = vpop.f32.mrf.mxu0
    %v297 = vadd.f32 %v118, %v296
    %298 = vmatmul.bf16.gmra.mxu0 %v81
    %v299 = vpop.f32.mrf.mxu0
    %v300 = vadd.f32 %v118, %v299
    %v301 = vpop.f32.mrf.mxu0
    %v302 = vadd.f32 %v118, %v301
    %303 = vmatmul.bf16.gmra.mxu0 %v82
    %v304 = vpop.f32.mrf.mxu0
    %v305 = vadd.f32 %v118, %v304
    %v306 = vpop.f32.mrf.mxu0
    %v307 = vadd.f32 %v118, %v306
    %308 = vdwg.mxu0
    %309 = vmatpush.bf16.msra.mxu0 %v226
    %310 = vmatpush.bf16.msra.mxu0 %v223
    %311 = vmatpush.bf16.msra.mxu0 %v220
    %312 = vmatpush.bf16.msra.mxu0 %v217
    %313 = vmatpush.bf16.msra.mxu0 %v214
    %314 = vmatpush.bf16.msra.mxu0 %v211
    %315 = vmatpush.bf16.msra.mxu0 %v208
    %316 = vmatpush.bf16.msra.mxu0 %v205
    %317 = vmatmul.bf16.gmra.mxu0 %v79
    %v318 = vpop.f32.mrf.mxu0
    %v319 = vadd.f32 %v119, %v318
    %v320 = vpop.f32.mrf.mxu0
    %v321 = vadd.f32 %v119, %v320
    %322 = vmatmul.bf16.gmra.mxu0 %v80
    %v323 = vpop.f32.mrf.mxu0
    %v324 = vadd.f32 %v119, %v323
    %v325 = vpop.f32.mrf.mxu0
    %v326 = vadd.f32 %v119, %v325
    %327 = vmatmul.bf16.gmra.mxu0 %v81
    %v328 = vpop.f32.mrf.mxu0
    %v329 = vadd.f32 %v119, %v328
    %v330 = vpop.f32.mrf.mxu0
    %v331 = vadd.f32 %v119, %v330
    %332 = vmatmul.bf16.gmra.mxu0 %v82
    %v333 = vpop.f32.mrf.mxu0
    %v334 = vadd.f32 %v119, %v333
    %v335 = vpop.f32.mrf.mxu0
    %v336 = vadd.f32 %v119, %v335
    %337 = vdwg.mxu0
    %338 = vst [vmem:[#allocation2] sm:$0xff] %v261
    %339 = vst [vmem:[#allocation2 + $0x8] sm:$0xff] %v290
    %340 = vst [vmem:[#allocation2 + $0x10] sm:$0xff] %v319
    %341 = vst [vmem:[#allocation2 + $0x18] sm:$0xff] %v263
    %342 = vst [vmem:[#allocation2 + $0x20] sm:$0xff] %v292
    %343 = vst [vmem:[#allocation2 + $0x28] sm:$0xff] %v321
    %344 = vst [vmem:[#allocation2 + $0x30] sm:$0xff] %v266
    %345 = vst [vmem:[#allocation2 + $0x38] sm:$0xff] %v295
    %346 = vst [vmem:[#allocation2 + $0x40] sm:$0xff] %v324
    %347 = vst [vmem:[#allocation2 + $0x48] sm:$0xff] %v268
    %348 = vst [vmem:[#allocation2 + $0x50] sm:$0xff] %v297
    %349 = vst [vmem:[#allocation2 + $0x58] sm:$0xff] %v326
    %350 = vst [vmem:[#allocation2 + $0x60] sm:$0xff] %v271
    %351 = vst [vmem:[#allocation2 + $0x68] sm:$0xff] %v300
    %352 = vst [vmem:[#allocation2 + $0x70] sm:$0xff] %v329
    %353 = vst [vmem:[#allocation2 + $0x78] sm:$0xff] %v273
    %354 = vst [vmem:[#allocation2 + $0x80] sm:$0xff] %v302
    %355 = vst [vmem:[#allocation2 + $0x88] sm:$0xff] %v331
    %356 = vst [vmem:[#allocation2 + $0x90] sm:$0xff] %v276
    %357 = vst [vmem:[#allocation2 + $0x98] sm:$0xff] %v305
    %358 = vst [vmem:[#allocation2 + $0xa0] sm:$0xff] %v334
    %359 = vst [vmem:[#allocation2 + $0xa8] sm:$0xff] %v278
    %360 = vst [vmem:[#allocation2 + $0xb0] sm:$0xff] %v307
    %361 = vst [vmem:[#allocation2 + $0xb8] sm:$0xff] %v336
    %362 = vst [vmem:[#allocation3] sm:$0xff] 0.0
    %v363 = vld [vmem:[#allocation9] sm:$0xff]
    %v364 = vld [vmem:[#allocation9 + $0x8] sm:$0xf]
    %v365 = vld [vmem:[#allocation9 + $0xc] sm:$0xff]
    %v366 = vld [vmem:[#allocation9 + $0x14] sm:$0xf]
    %v367 = vld [vmem:[#allocation9 + $0x18] sm:$0xff]
    %v368 = vld [vmem:[#allocation9 + $0x20] sm:$0xf]
    %v369 = vld [vmem:[#allocation9 + $0x24] sm:$0xff]
    %v370 = vld [vmem:[#allocation9 + $0x2c] sm:$0xf]
    %v371 = vld [vmem:[#allocation9 + $0x30] sm:$0xff]
    %v372 = vld [vmem:[#allocation9 + $0x38] sm:$0xf]
    %v373 = vld [vmem:[#allocation9 + $0x3c] sm:$0xff]
    %v374 = vld [vmem:[#allocation9 + $0x44] sm:$0xf]
    %v375 = vld [vmem:[#allocation9 + $0x48] sm:$0xff]
    %v376 = vld [vmem:[#allocation9 + $0x50] sm:$0xf]
    %v377 = vld [vmem:[#allocation9 + $0x54] sm:$0xff]
    %v378 = vld [vmem:[#allocation9 + $0x5c] sm:$0xf]
    %v379 = vld [vmem:[#allocation9 + $0x60] sm:$0xff]
    %v380 = vld [vmem:[#allocation9 + $0x68] sm:$0xf]
    %v381 = vld [vmem:[#allocation9 + $0x6c] sm:$0xff]
    %v382 = vld [vmem:[#allocation9 + $0x74] sm:$0xf]
    %v383 = vld [vmem:[#allocation9 + $0x78] sm:$0xff]
    %v384 = vld [vmem:[#allocation9 + $0x80] sm:$0xf]
    %v385 = vld [vmem:[#allocation9 + $0x84] sm:$0xff]
    %v386 = vld [vmem:[#allocation9 + $0x8c] sm:$0xf]
    %v387 = vld [vmem:[#allocation9 + $0x90] sm:$0xff]
    %v388 = vld [vmem:[#allocation9 + $0x98] sm:$0xf]
    %v389 = vld [vmem:[#allocation9 + $0x9c] sm:$0xff]
    %v390 = vld [vmem:[#allocation9 + $0xa4] sm:$0xf]
    %v391 = vld [vmem:[#allocation9 + $0xa8] sm:$0xff]
    %v392 = vld [vmem:[#allocation9 + $0xb0] sm:$0xf]
    %v393 = vld [vmem:[#allocation9 + $0xb4] sm:$0xff]
    %v394 = vld [vmem:[#allocation9 + $0xbc] sm:$0xf]
    %v395 = vld [vmem:[%s5] sm:$0x7]
    %v396 = vld [vmem:[%s1] sm:$0xff]
    %v397 = vld [vmem:[#allocation3] sm:$0xff]
    %s398 = smul.u32 0, 3
    %s399 = smul.addr %s398, 8
    %s400 = scalar_lea.vmem [#allocation2], %s399
    %v401 = vld [vmem:[%s400] sm:$0xff]
    %v402 = vld [vmem:[%s400 + $0x8] sm:$0xff]
    %v403 = vld [vmem:[%s400 + $0x10] sm:$0xff]
    %v404 = vpack.c.bf16 %v397, %v397
    %v406 = vperm.slane %v395, 0
    %v407 = vperm.slane %v395, 1
    %v408 = vperm.slane %v395, 2
    %v444 = vunpack.c.l.b16 %v363
    %v445 = vunpack.c.h.b16 %v363
    %v446 = vunpack.c.l.b16 %v364
    %v447 = vunpack.c.l.b16 %v365
    %v448 = vunpack.c.h.b16 %v365
    %v449 = vunpack.c.l.b16 %v366
    %v450 = vunpack.c.l.b16 %v367
    %v451 = vunpack.c.h.b16 %v367
    %v452 = vunpack.c.l.b16 %v368
    %v453 = vunpack.c.l.b16 %v369
    %v454 = vunpack.c.h.b16 %v369
    %v455 = vunpack.c.l.b16 %v370
    %v456 = vunpack.c.l.b16 %v371
    %v457 = vunpack.c.h.b16 %v371
    %v458 = vunpack.c.l.b16 %v372
    %v459 = vunpack.c.l.b16 %v373
    %v460 = vunpack.c.h.b16 %v373
    %v461 = vunpack.c.l.b16 %v374
    %v462 = vunpack.c.l.b16 %v375
    %v463 = vunpack.c.h.b16 %v375
    %v464 = vunpack.c.l.b16 %v376
    %v465 = vunpack.c.l.b16 %v377
    %v466 = vunpack.c.h.b16 %v377
    %v467 = vunpack.c.l.b16 %v378
    %v468 = vunpack.c.l.b16 %v379
    %v469 = vunpack.c.h.b16 %v379
    %v470 = vunpack.c.l.b16 %v380
    %v471 = vunpack.c.l.b16 %v381
    %v472 = vunpack.c.h.b16 %v381
    %v473 = vunpack.c.l.b16 %v382
    %v474 = vunpack.c.l.b16 %v383
    %v475 = vunpack.c.h.b16 %v383
    %v476 = vunpack.c.l.b16 %v384
    %v477 = vunpack.c.l.b16 %v385
    %v478 = vunpack.c.h.b16 %v385
    %v479 = vunpack.c.l.b16 %v386
    %v480 = vunpack.c.l.b16 %v387
    %v481 = vunpack.c.h.b16 %v387
    %v482 = vunpack.c.l.b16 %v388
    %v483 = vunpack.c.l.b16 %v389
    %v484 = vunpack.c.h.b16 %v389
    %v485 = vunpack.c.l.b16 %v390
    %v486 = vunpack.c.l.b16 %v391
    %v487 = vunpack.c.h.b16 %v391
    %v488 = vunpack.c.l.b16 %v392
    %v489 = vunpack.c.l.b16 %v393
    %v490 = vunpack.c.h.b16 %v393
    %v491 = vunpack.c.l.b16 %v394
    %v492 = vpack.c.b16 %v447, %v444
    %v493 = vpack.c.b16 %v448, %v445
    %v494 = vpack.c.b16 %v449, %v446
    %v495 = vpack.c.b16 %v453, %v450
    %v496 = vpack.c.b16 %v454, %v451
    %v497 = vpack.c.b16 %v455, %v452
    %v498 = vpack.c.b16 %v459, %v456
    %v499 = vpack.c.b16 %v460, %v457
    %v500 = vpack.c.b16 %v461, %v458
    %v501 = vpack.c.b16 %v465, %v462
    %v502 = vpack.c.b16 %v466, %v463
    %v503 = vpack.c.b16 %v467, %v464
    %v504 = vpack.c.b16 %v471, %v468
    %v505 = vpack.c.b16 %v472, %v469
    %v506 = vpack.c.b16 %v473, %v470
    %v507 = vpack.c.b16 %v477, %v474
    %v508 = vpack.c.b16 %v478, %v475
    %v509 = vpack.c.b16 %v479, %v476
    %v510 = vpack.c.b16 %v483, %v480
    %v511 = vpack.c.b16 %v484, %v481
    %v512 = vpack.c.b16 %v485, %v482
    %v513 = vpack.c.b16 %v489, %v486
    %v514 = vpack.c.b16 %v490, %v487
    %v515 = vpack.c.b16 %v491, %v488
    %540 = vmatpush.bf16.msra.mxu0 %v513
    %541 = vmatpush.bf16.msra.mxu0 %v510
    %542 = vmatpush.bf16.msra.mxu0 %v507
    %543 = vmatpush.bf16.msra.mxu0 %v504
    %544 = vmatpush.bf16.msra.mxu0 %v501
    %545 = vmatpush.bf16.msra.mxu0 %v498
    %546 = vmatpush.bf16.msra.mxu0 %v495
    %547 = vmatpush.bf16.msra.mxu0 %v492
    %548 = vmatmul.bf16.gmra.mxu0 %v404
    %v549 = vpop.f32.mrf.mxu0
    %v550 = vadd.f32 %v406, %v549
    %v551 = vpop.f32.mrf.mxu0
    %552 = vdwg.mxu0
    %553 = vmatpush.bf16.msra.mxu0 %v514
    %554 = vmatpush.bf16.msra.mxu0 %v511
    %555 = vmatpush.bf16.msra.mxu0 %v508
    %556 = vmatpush.bf16.msra.mxu0 %v505
    %557 = vmatpush.bf16.msra.mxu0 %v502
    %558 = vmatpush.bf16.msra.mxu0 %v499
    %559 = vmatpush.bf16.msra.mxu0 %v496
    %560 = vmatpush.bf16.msra.mxu0 %v493
    %561 = vmatmul.bf16.gmra.mxu0 %v404
    %v562 = vpop.f32.mrf.mxu0
    %v563 = vadd.f32 %v407, %v562
    %v564 = vpop.f32.mrf.mxu0
    %565 = vdwg.mxu0
    %566 = vmatpush.bf16.msra.mxu0 %v515
    %567 = vmatpush.bf16.msra.mxu0 %v512
    %568 = vmatpush.bf16.msra.mxu0 %v509
    %569 = vmatpush.bf16.msra.mxu0 %v506
    %570 = vmatpush.bf16.msra.mxu0 %v503
    %571 = vmatpush.bf16.msra.mxu0 %v500
    %572 = vmatpush.bf16.msra.mxu0 %v497
    %573 = vmatpush.bf16.msra.mxu0 %v494
    %574 = vmatmul.bf16.gmra.mxu0 %v404
    %v575 = vpop.f32.mrf.mxu0
    %v576 = vadd.f32 %v408, %v575
    %v577 = vpop.f32.mrf.mxu0
    %578 = vdwg.mxu0
    %v579 = vadd.f32 %v401, %v550
    %v580 = vxor.u32 %v579, 2147483648
    %v581 = vmul.f32 %v580, 1.442695
    %v582 = vpow.pop %v581
    %v583 = vadd.f32 %v582, 1.0
    %v584 = vrcp.pop %v583
    %v585 = vmul.f32 %v583, %v584
    %v586 = vsub.f32 1.0, %v585
    %v587 = vmul.f32 %v584, %v586
    %v588 = vadd.f32 %v584, %v587
    %vm589 = vweird.f32 %v583
    %vm590 = vweird.f32 %v584
    %vm591 = vmor %vm589, %vm590
    %v592 = vsel %vm591, %v584, %v588
    %v593 = vand.u32 2147483647, %v583
    %vm594 = vcmp.eq.f32.partialorder %v593, 8.507059e+37
    %v595 = vand.u32 %v583, 2147483648
    %v596 = vor.u32 1.1754944e-38, %v595
    %v597 = vsel %vm594, %v596, %v592
    %v598 = vmul.f32 1.0, %v597
    %v599 = vadd.f32 %v402, %v563
    %v600 = vxor.u32 %v599, 2147483648
    %v601 = vmul.f32 %v600, 1.442695
    %v602 = vpow.pop %v601
    %v603 = vadd.f32 %v602, 1.0
    %v604 = vrcp.pop %v603
    %v605 = vmul.f32 %v603, %v604
    %v606 = vsub.f32 1.0, %v605
    %v607 = vmul.f32 %v604, %v606
    %v608 = vadd.f32 %v604, %v607
    %vm609 = vweird.f32 %v603
    %vm610 = vweird.f32 %v604
    %vm611 = vmor %vm609, %vm610
    %v612 = vsel %vm611, %v604, %v608
    %v613 = vand.u32 2147483647, %v603
    %vm614 = vcmp.eq.f32.partialorder %v613, 8.507059e+37
    %v615 = vand.u32 %v603, 2147483648
    %v616 = vor.u32 1.1754944e-38, %v615
    %v617 = vsel %vm614, %v616, %v612
    %v618 = vmul.f32 1.0, %v617
    %v619 = vmul.f32 %v598, %v576
    %v620 = vadd.f32 %v403, %v619
    %v621 = vtanh.pop %v620
    %v622 = vsub.f32 1.0, %v618
    %v623 = vmul.f32 %v622, %v621
    %v624 = vmul.f32 %v618, %v397
    %v625 = vadd.f32 %v623, %v624
    %vm626 = vcmp.gt.s32.totalorder %v396, 0
    %v627 = vsel %vm626, 1, 0
    %628 = vset.pattern.permute.xlu0 0
    %629 = vperm.xlu0 %628, %v627
    %v630 = vpop.permute.xlu0 %629
    %vm631 = vcmp.eq.s32.totalorder %v630, 1
    %v632 = vsel %vm631, %v625, %v397
    %633 = vst [vmem:[#allocation3] sm:$0xff] %v632
    %634 = vst [vmem:[#allocation10] sm:$0xff] %v632
    %v635 = vld [vmem:[#allocation3] sm:$0xff]
    %s636 = smul.u32 1, 3
    %s637 = smul.addr %s636, 8
    %s638 = scalar_lea.vmem [#allocation2], %s637
    %v639 = vld [vmem:[%s638] sm:$0xff]
    %v640 = vld [vmem:[%s638 + $0x8] sm:$0xff]
    %v641 = vld [vmem:[%s638 + $0x10] sm:$0xff]
    %v642 = vpack.c.bf16 %v635, %v635
    %643 = vmatpush.bf16.msra.mxu0 %v513
    %644 = vmatpush.bf16.msra.mxu0 %v510
    %645 = vmatpush.bf16.msra.mxu0 %v507
    %646 = vmatpush.bf16.msra.mxu0 %v504
    %647 = vmatpush.bf16.msra.mxu0 %v501
    %648 = vmatpush.bf16.msra.mxu0 %v498
    %649 = vmatpush.bf16.msra.mxu0 %v495
    %650 = vmatpush.bf16.msra.mxu0 %v492
    %651 = vmatmul.bf16.gmra.mxu0 %v642
    %v652 = vpop.f32.mrf.mxu0
    %v653 = vadd.f32 %v406, %v652
    %v654 = vpop.f32.mrf.mxu0
    %655 = vdwg.mxu0
    %656 = vmatpush.bf16.msra.mxu0 %v514
    %657 = vmatpush.bf16.msra.mxu0 %v511
    %658 = vmatpush.bf16.msra.mxu0 %v508
    %659 = vmatpush.bf16.msra.mxu0 %v505
    %660 = vmatpush.bf16.msra.mxu0 %v502
    %661 = vmatpush.bf16.msra.mxu0 %v499
    %662 = vmatpush.bf16.msra.mxu0 %v496
    %663 = vmatpush.bf16.msra.mxu0 %v493
    %664 = vmatmul.bf16.gmra.mxu0 %v642
    %v665 = vpop.f32.mrf.mxu0
    %v666 = vadd.f32 %v407, %v665
    %v667 = vpop.f32.mrf.mxu0
    %668 = vdwg.mxu0
    %669 = vmatpush.bf16.msra.mxu0 %v515
    %670 = vmatpush.bf16.msra.mxu0 %v512
    %671 = vmatpush.bf16.msra.mxu0 %v509
    %672 = vmatpush.bf16.msra.mxu0 %v506
    %673 = vmatpush.bf16.msra.mxu0 %v503
    %674 = vmatpush.bf16.msra.mxu0 %v500
    %675 = vmatpush.bf16.msra.mxu0 %v497
    %676 = vmatpush.bf16.msra.mxu0 %v494
    %677 = vmatmul.bf16.gmra.mxu0 %v642
    %v678 = vpop.f32.mrf.mxu0
    %v679 = vadd.f32 %v408, %v678
    %v680 = vpop.f32.mrf.mxu0
    %681 = vdwg.mxu0
    %v682 = vadd.f32 %v639, %v653
    %v683 = vxor.u32 %v682, 2147483648
    %v684 = vmul.f32 %v683, 1.442695
    %v685 = vpow.pop %v684
    %v686 = vadd.f32 %v685, 1.0
    %v687 = vrcp.pop %v686
    %v688 = vmul.f32 %v686, %v687
    %v689 = vsub.f32 1.0, %v688
    %v690 = vmul.f32 %v687, %v689
    %v691 = vadd.f32 %v687, %v690
    %vm692 = vweird.f32 %v686
    %vm693 = vweird.f32 %v687
    %vm694 = vmor %vm692, %vm693
    %v695 = vsel %vm694, %v687, %v691
    %v696 = vand.u32 2147483647, %v686
    %vm697 = vcmp.eq.f32.partialorder %v696, 8.507059e+37
    %v698 = vand.u32 %v686, 2147483648
    %v699 = vor.u32 1.1754944e-38, %v698
    %v700 = vsel %vm697, %v699, %v695
    %v701 = vmul.f32 1.0, %v700
    %v702 = vadd.f32 %v640, %v666
    %v703 = vxor.u32 %v702, 2147483648
    %v704 = vmul.f32 %v703, 1.442695
    %v705 = vpow.pop %v704
    %v706 = vadd.f32 %v705, 1.0
    %v707 = vrcp.pop %v706
    %v708 = vmul.f32 %v706, %v707
    %v709 = vsub.f32 1.0, %v708
    %v710 = vmul.f32 %v707, %v709
    %v711 = vadd.f32 %v707, %v710
    %vm712 = vweird.f32 %v706
    %vm713 = vweird.f32 %v707
    %vm714 = vmor %vm712, %vm713
    %v715 = vsel %vm714, %v707, %v711
    %v716 = vand.u32 2147483647, %v706
    %vm717 = vcmp.eq.f32.partialorder %v716, 8.507059e+37
    %v718 = vand.u32 %v706, 2147483648
    %v719 = vor.u32 1.1754944e-38, %v718
    %v720 = vsel %vm717, %v719, %v715
    %v721 = vmul.f32 1.0, %v720
    %v722 = vmul.f32 %v701, %v679
    %v723 = vadd.f32 %v641, %v722
    %v724 = vtanh.pop %v723
    %v725 = vsub.f32 1.0, %v721
    %v726 = vmul.f32 %v725, %v724
    %v727 = vmul.f32 %v721, %v635
    %v728 = vadd.f32 %v726, %v727
    %vm729 = vcmp.gt.s32.totalorder %v396, 1
    %v730 = vsel %vm729, 1, 0
    %731 = vset.pattern.permute.xlu0 0
    %732 = vperm.xlu0 %731, %v730
    %v733 = vpop.permute.xlu0 %732
    %vm734 = vcmp.eq.s32.totalorder %v733, 1
    %v735 = vsel %vm734, %v728, %v635
    %736 = vst [vmem:[#allocation3] sm:$0xff] %v735
    %s737 = scalar_lea.vmem [#allocation10], 8
    %738 = vst [vmem:[%s737] sm:$0xff] %v735
    %v739 = vld [vmem:[#allocation3] sm:$0xff]
    %s740 = smul.u32 2, 3
    %s741 = smul.addr %s740, 8
    %s742 = scalar_lea.vmem [#allocation2], %s741
    %v743 = vld [vmem:[%s742] sm:$0xff]
    %v744 = vld [vmem:[%s742 + $0x8] sm:$0xff]
    %v745 = vld [vmem:[%s742 + $0x10] sm:$0xff]
    %v746 = vpack.c.bf16 %v739, %v739
    %747 = vmatpush.bf16.msra.mxu0 %v513
    %748 = vmatpush.bf16.msra.mxu0 %v510
    %749 = vmatpush.bf16.msra.mxu0 %v507
    %750 = vmatpush.bf16.msra.mxu0 %v504
    %751 = vmatpush.bf16.msra.mxu0 %v501
    %752 = vmatpush.bf16.msra.mxu0 %v498
    %753 = vmatpush.bf16.msra.mxu0 %v495
    %754 = vmatpush.bf16.msra.mxu0 %v492
    %755 = vmatmul.bf16.gmra.mxu0 %v746
    %v756 = vpop.f32.mrf.mxu0
    %v757 = vadd.f32 %v406, %v756
    %v758 = vpop.f32.mrf.mxu0
    %759 = vdwg.mxu0
    %760 = vmatpush.bf16.msra.mxu0 %v514
    %761 = vmatpush.bf16.msra.mxu0 %v511
    %762 = vmatpush.bf16.msra.mxu0 %v508
    %763 = vmatpush.bf16.msra.mxu0 %v505
    %764 = vmatpush.bf16.msra.mxu0 %v502
    %765 = vmatpush.bf16.msra.mxu0 %v499
    %766 = vmatpush.bf16.msra.mxu0 %v496
    %767 = vmatpush.bf16.msra.mxu0 %v493
    %768 = vmatmul.bf16.gmra.mxu0 %v746
    %v769 = vpop.f32.mrf.mxu0
    %v770 = vadd.f32 %v407, %v769
    %v771 = vpop.f32.mrf.mxu0
    %772 = vdwg.mxu0
    %773 = vmatpush.bf16.msra.mxu0 %v515
    %774 = vmatpush.bf16.msra.mxu0 %v512
    %775 = vmatpush.bf16.msra.mxu0 %v509
    %776 = vmatpush.bf16.msra.mxu0 %v506
    %777 = vmatpush.bf16.msra.mxu0 %v503
    %778 = vmatpush.bf16.msra.mxu0 %v500
    %779 = vmatpush.bf16.msra.mxu0 %v497
    %780 = vmatpush.bf16.msra.mxu0 %v494
    %781 = vmatmul.bf16.gmra.mxu0 %v746
    %v782 = vpop.f32.mrf.mxu0
    %v783 = vadd.f32 %v408, %v782
    %v784 = vpop.f32.mrf.mxu0
    %785 = vdwg.mxu0
    %v786 = vadd.f32 %v743, %v757
    %v787 = vxor.u32 %v786, 2147483648
    %v788 = vmul.f32 %v787, 1.442695
    %v789 = vpow.pop %v788
    %v790 = vadd.f32 %v789, 1.0
    %v791 = vrcp.pop %v790
    %v792 = vmul.f32 %v790, %v791
    %v793 = vsub.f32 1.0, %v792
    %v794 = vmul.f32 %v791, %v793
    %v795 = vadd.f32 %v791, %v794
    %vm796 = vweird.f32 %v790
    %vm797 = vweird.f32 %v791
    %vm798 = vmor %vm796, %vm797
    %v799 = vsel %vm798, %v791, %v795
    %v800 = vand.u32 2147483647, %v790
    %vm801 = vcmp.eq.f32.partialorder %v800, 8.507059e+37
    %v802 = vand.u32 %v790, 2147483648
    %v803 = vor.u32 1.1754944e-38, %v802
    %v804 = vsel %vm801, %v803, %v799
    %v805 = vmul.f32 1.0, %v804
    %v806 = vadd.f32 %v744, %v770
    %v807 = vxor.u32 %v806, 2147483648
    %v808 = vmul.f32 %v807, 1.442695
    %v809 = vpow.pop %v808
    %v810 = vadd.f32 %v809, 1.0
    %v811 = vrcp.pop %v810
    %v812 = vmul.f32 %v810, %v811
    %v813 = vsub.f32 1.0, %v812
    %v814 = vmul.f32 %v811, %v813
    %v815 = vadd.f32 %v811, %v814
    %vm816 = vweird.f32 %v810
    %vm817 = vweird.f32 %v811
    %vm818 = vmor %vm816, %vm817
    %v819 = vsel %vm818, %v811, %v815
    %v820 = vand.u32 2147483647, %v810
    %vm821 = vcmp.eq.f32.partialorder %v820, 8.507059e+37
    %v822 = vand.u32 %v810, 2147483648
    %v823 = vor.u32 1.1754944e-38, %v822
    %v824 = vsel %vm821, %v823, %v819
    %v825 = vmul.f32 1.0, %v824
    %v826 = vmul.f32 %v805, %v783
    %v827 = vadd.f32 %v745, %v826
    %v828 = vtanh.pop %v827
    %v829 = vsub.f32 1.0, %v825
    %v830 = vmul.f32 %v829, %v828
    %v831 = vmul.f32 %v825, %v739
    %v832 = vadd.f32 %v830, %v831
    %vm833 = vcmp.gt.s32.totalorder %v396, 2
    %v834 = vsel %vm833, 1, 0
    %835 = vset.pattern.permute.xlu0 0
    %836 = vperm.xlu0 %835, %v834
    %v837 = vpop.permute.xlu0 %836
    %vm838 = vcmp.eq.s32.totalorder %v837, 1
    %v839 = vsel %vm838, %v832, %v739
    %840 = vst [vmem:[#allocation3] sm:$0xff] %v839
    %s841 = scalar_lea.vmem [#allocation10], 16
    %842 = vst [vmem:[%s841] sm:$0xff] %v839
    %v843 = vld [vmem:[#allocation3] sm:$0xff]
    %s844 = smul.u32 3, 3
    %s845 = smul.addr %s844, 8
    %s846 = scalar_lea.vmem [#allocation2], %s845
    %v847 = vld [vmem:[%s846] sm:$0xff]
    %v848 = vld [vmem:[%s846 + $0x8] sm:$0xff]
    %v849 = vld [vmem:[%s846 + $0x10] sm:$0xff]
    %v850 = vpack.c.bf16 %v843, %v843
    %851 = vmatpush.bf16.msra.mxu0 %v513
    %852 = vmatpush.bf16.msra.mxu0 %v510
    %853 = vmatpush.bf16.msra.mxu0 %v507
    %854 = vmatpush.bf16.msra.mxu0 %v504
    %855 = vmatpush.bf16.msra.mxu0 %v501
    %856 = vmatpush.bf16.msra.mxu0 %v498
    %857 = vmatpush.bf16.msra.mxu0 %v495
    %858 = vmatpush.bf16.msra.mxu0 %v492
    %859 = vmatmul.bf16.gmra.mxu0 %v850
    %v860 = vpop.f32.mrf.mxu0
    %v861 = vadd.f32 %v406, %v860
    %v862 = vpop.f32.mrf.mxu0
    %863 = vdwg.mxu0
    %864 = vmatpush.bf16.msra.mxu0 %v514
    %865 = vmatpush.bf16.msra.mxu0 %v511
    %866 = vmatpush.bf16.msra.mxu0 %v508
    %867 = vmatpush.bf16.msra.mxu0 %v505
    %868 = vmatpush.bf16.msra.mxu0 %v502
    %869 = vmatpush.bf16.msra.mxu0 %v499
    %870 = vmatpush.bf16.msra.mxu0 %v496
    %871 = vmatpush.bf16.msra.mxu0 %v493
    %872 = vmatmul.bf16.gmra.mxu0 %v850
    %v873 = vpop.f32.mrf.mxu0
    %v874 = vadd.f32 %v407, %v873
    %v875 = vpop.f32.mrf.mxu0
    %876 = vdwg.mxu0
    %877 = vmatpush.bf16.msra.mxu0 %v515
    %878 = vmatpush.bf16.msra.mxu0 %v512
    %879 = vmatpush.bf16.msra.mxu0 %v509
    %880 = vmatpush.bf16.msra.mxu0 %v506
    %881 = vmatpush.bf16.msra.mxu0 %v503
    %882 = vmatpush.bf16.msra.mxu0 %v500
    %883 = vmatpush.bf16.msra.mxu0 %v497
    %884 = vmatpush.bf16.msra.mxu0 %v494
    %885 = vmatmul.bf16.gmra.mxu0 %v850
    %v886 = vpop.f32.mrf.mxu0
    %v887 = vadd.f32 %v408, %v886
    %v888 = vpop.f32.mrf.mxu0
    %889 = vdwg.mxu0
    %v890 = vadd.f32 %v847, %v861
    %v891 = vxor.u32 %v890, 2147483648
    %v892 = vmul.f32 %v891, 1.442695
    %v893 = vpow.pop %v892
    %v894 = vadd.f32 %v893, 1.0
    %v895 = vrcp.pop %v894
    %v896 = vmul.f32 %v894, %v895
    %v897 = vsub.f32 1.0, %v896
    %v898 = vmul.f32 %v895, %v897
    %v899 = vadd.f32 %v895, %v898
    %vm900 = vweird.f32 %v894
    %vm901 = vweird.f32 %v895
    %vm902 = vmor %vm900, %vm901
    %v903 = vsel %vm902, %v895, %v899
    %v904 = vand.u32 2147483647, %v894
    %vm905 = vcmp.eq.f32.partialorder %v904, 8.507059e+37
    %v906 = vand.u32 %v894, 2147483648
    %v907 = vor.u32 1.1754944e-38, %v906
    %v908 = vsel %vm905, %v907, %v903
    %v909 = vmul.f32 1.0, %v908
    %v910 = vadd.f32 %v848, %v874
    %v911 = vxor.u32 %v910, 2147483648
    %v912 = vmul.f32 %v911, 1.442695
    %v913 = vpow.pop %v912
    %v914 = vadd.f32 %v913, 1.0
    %v915 = vrcp.pop %v914
    %v916 = vmul.f32 %v914, %v915
    %v917 = vsub.f32 1.0, %v916
    %v918 = vmul.f32 %v915, %v917
    %v919 = vadd.f32 %v915, %v918
    %vm920 = vweird.f32 %v914
    %vm921 = vweird.f32 %v915
    %vm922 = vmor %vm920, %vm921
    %v923 = vsel %vm922, %v915, %v919
    %v924 = vand.u32 2147483647, %v914
    %vm925 = vcmp.eq.f32.partialorder %v924, 8.507059e+37
    %v926 = vand.u32 %v914, 2147483648
    %v927 = vor.u32 1.1754944e-38, %v926
    %v928 = vsel %vm925, %v927, %v923
    %v929 = vmul.f32 1.0, %v928
    %v930 = vmul.f32 %v909, %v887
    %v931 = vadd.f32 %v849, %v930
    %v932 = vtanh.pop %v931
    %v933 = vsub.f32 1.0, %v929
    %v934 = vmul.f32 %v933, %v932
    %v935 = vmul.f32 %v929, %v843
    %v936 = vadd.f32 %v934, %v935
    %vm937 = vcmp.gt.s32.totalorder %v396, 3
    %v938 = vsel %vm937, 1, 0
    %939 = vset.pattern.permute.xlu0 0
    %940 = vperm.xlu0 %939, %v938
    %v941 = vpop.permute.xlu0 %940
    %vm942 = vcmp.eq.s32.totalorder %v941, 1
    %v943 = vsel %vm942, %v936, %v843
    %944 = vst [vmem:[#allocation3] sm:$0xff] %v943
    %s945 = scalar_lea.vmem [#allocation10], 24
    %946 = vst [vmem:[%s945] sm:$0xff] %v943
    %v947 = vld [vmem:[#allocation3] sm:$0xff]
    %s948 = smul.u32 4, 3
    %s949 = smul.addr %s948, 8
    %s950 = scalar_lea.vmem [#allocation2], %s949
    %v951 = vld [vmem:[%s950] sm:$0xff]
    %v952 = vld [vmem:[%s950 + $0x8] sm:$0xff]
    %v953 = vld [vmem:[%s950 + $0x10] sm:$0xff]
    %v954 = vpack.c.bf16 %v947, %v947
    %955 = vmatpush.bf16.msra.mxu0 %v513
    %956 = vmatpush.bf16.msra.mxu0 %v510
    %957 = vmatpush.bf16.msra.mxu0 %v507
    %958 = vmatpush.bf16.msra.mxu0 %v504
    %959 = vmatpush.bf16.msra.mxu0 %v501
    %960 = vmatpush.bf16.msra.mxu0 %v498
    %961 = vmatpush.bf16.msra.mxu0 %v495
    %962 = vmatpush.bf16.msra.mxu0 %v492
    %963 = vmatmul.bf16.gmra.mxu0 %v954
    %v964 = vpop.f32.mrf.mxu0
    %v965 = vadd.f32 %v406, %v964
    %v966 = vpop.f32.mrf.mxu0
    %967 = vdwg.mxu0
    %968 = vmatpush.bf16.msra.mxu0 %v514
    %969 = vmatpush.bf16.msra.mxu0 %v511
    %970 = vmatpush.bf16.msra.mxu0 %v508
    %971 = vmatpush.bf16.msra.mxu0 %v505
    %972 = vmatpush.bf16.msra.mxu0 %v502
    %973 = vmatpush.bf16.msra.mxu0 %v499
    %974 = vmatpush.bf16.msra.mxu0 %v496
    %975 = vmatpush.bf16.msra.mxu0 %v493
    %976 = vmatmul.bf16.gmra.mxu0 %v954
    %v977 = vpop.f32.mrf.mxu0
    %v978 = vadd.f32 %v407, %v977
    %v979 = vpop.f32.mrf.mxu0
    %980 = vdwg.mxu0
    %981 = vmatpush.bf16.msra.mxu0 %v515
    %982 = vmatpush.bf16.msra.mxu0 %v512
    %983 = vmatpush.bf16.msra.mxu0 %v509
    %984 = vmatpush.bf16.msra.mxu0 %v506
    %985 = vmatpush.bf16.msra.mxu0 %v503
    %986 = vmatpush.bf16.msra.mxu0 %v500
    %987 = vmatpush.bf16.msra.mxu0 %v497
    %988 = vmatpush.bf16.msra.mxu0 %v494
    %989 = vmatmul.bf16.gmra.mxu0 %v954
    %v990 = vpop.f32.mrf.mxu0
    %v991 = vadd.f32 %v408, %v990
    %v992 = vpop.f32.mrf.mxu0
    %993 = vdwg.mxu0
    %v994 = vadd.f32 %v951, %v965
    %v995 = vxor.u32 %v994, 2147483648
    %v996 = vmul.f32 %v995, 1.442695
    %v997 = vpow.pop %v996
    %v998 = vadd.f32 %v997, 1.0
    %v999 = vrcp.pop %v998
    %v1000 = vmul.f32 %v998, %v999
    %v1001 = vsub.f32 1.0, %v1000
    %v1002 = vmul.f32 %v999, %v1001
    %v1003 = vadd.f32 %v999, %v1002
    %vm1004 = vweird.f32 %v998
    %vm1005 = vweird.f32 %v999
    %vm1006 = vmor %vm1004, %vm1005
    %v1007 = vsel %vm1006, %v999, %v1003
    %v1008 = vand.u32 2147483647, %v998
    %vm1009 = vcmp.eq.f32.partialorder %v1008, 8.507059e+37
    %v1010 = vand.u32 %v998, 2147483648
    %v1011 = vor.u32 1.1754944e-38, %v1010
    %v1012 = vsel %vm1009, %v1011, %v1007
    %v1013 = vmul.f32 1.0, %v1012
    %v1014 = vadd.f32 %v952, %v978
    %v1015 = vxor.u32 %v1014, 2147483648
    %v1016 = vmul.f32 %v1015, 1.442695
    %v1017 = vpow.pop %v1016
    %v1018 = vadd.f32 %v1017, 1.0
    %v1019 = vrcp.pop %v1018
    %v1020 = vmul.f32 %v1018, %v1019
    %v1021 = vsub.f32 1.0, %v1020
    %v1022 = vmul.f32 %v1019, %v1021
    %v1023 = vadd.f32 %v1019, %v1022
    %vm1024 = vweird.f32 %v1018
    %vm1025 = vweird.f32 %v1019
    %vm1026 = vmor %vm1024, %vm1025
    %v1027 = vsel %vm1026, %v1019, %v1023
    %v1028 = vand.u32 2147483647, %v1018
    %vm1029 = vcmp.eq.f32.partialorder %v1028, 8.507059e+37
    %v1030 = vand.u32 %v1018, 2147483648
    %v1031 = vor.u32 1.1754944e-38, %v1030
    %v1032 = vsel %vm1029, %v1031, %v1027
    %v1033 = vmul.f32 1.0, %v1032
    %v1034 = vmul.f32 %v1013, %v991
    %v1035 = vadd.f32 %v953, %v1034
    %v1036 = vtanh.pop %v1035
    %v1037 = vsub.f32 1.0, %v1033
    %v1038 = vmul.f32 %v1037, %v1036
    %v1039 = vmul.f32 %v1033, %v947
    %v1040 = vadd.f32 %v1038, %v1039
    %vm1041 = vcmp.gt.s32.totalorder %v396, 4
    %v1042 = vsel %vm1041, 1, 0
    %1043 = vset.pattern.permute.xlu0 0
    %1044 = vperm.xlu0 %1043, %v1042
    %v1045 = vpop.permute.xlu0 %1044
    %vm1046 = vcmp.eq.s32.totalorder %v1045, 1
    %v1047 = vsel %vm1046, %v1040, %v947
    %1048 = vst [vmem:[#allocation3] sm:$0xff] %v1047
    %s1049 = scalar_lea.vmem [#allocation10], 32
    %1050 = vst [vmem:[%s1049] sm:$0xff] %v1047
    %v1051 = vld [vmem:[#allocation3] sm:$0xff]
    %s1052 = smul.u32 5, 3
    %s1053 = smul.addr %s1052, 8
    %s1054 = scalar_lea.vmem [#allocation2], %s1053
    %v1055 = vld [vmem:[%s1054] sm:$0xff]
    %v1056 = vld [vmem:[%s1054 + $0x8] sm:$0xff]
    %v1057 = vld [vmem:[%s1054 + $0x10] sm:$0xff]
    %v1058 = vpack.c.bf16 %v1051, %v1051
    %1059 = vmatpush.bf16.msra.mxu0 %v513
    %1060 = vmatpush.bf16.msra.mxu0 %v510
    %1061 = vmatpush.bf16.msra.mxu0 %v507
    %1062 = vmatpush.bf16.msra.mxu0 %v504
    %1063 = vmatpush.bf16.msra.mxu0 %v501
    %1064 = vmatpush.bf16.msra.mxu0 %v498
    %1065 = vmatpush.bf16.msra.mxu0 %v495
    %1066 = vmatpush.bf16.msra.mxu0 %v492
    %1067 = vmatmul.bf16.gmra.mxu0 %v1058
    %v1068 = vpop.f32.mrf.mxu0
    %v1069 = vadd.f32 %v406, %v1068
    %v1070 = vpop.f32.mrf.mxu0
    %1071 = vdwg.mxu0
    %1072 = vmatpush.bf16.msra.mxu0 %v514
    %1073 = vmatpush.bf16.msra.mxu0 %v511
    %1074 = vmatpush.bf16.msra.mxu0 %v508
    %1075 = vmatpush.bf16.msra.mxu0 %v505
    %1076 = vmatpush.bf16.msra.mxu0 %v502
    %1077 = vmatpush.bf16.msra.mxu0 %v499
    %1078 = vmatpush.bf16.msra.mxu0 %v496
    %1079 = vmatpush.bf16.msra.mxu0 %v493
    %1080 = vmatmul.bf16.gmra.mxu0 %v1058
    %v1081 = vpop.f32.mrf.mxu0
    %v1082 = vadd.f32 %v407, %v1081
    %v1083 = vpop.f32.mrf.mxu0
    %1084 = vdwg.mxu0
    %1085 = vmatpush.bf16.msra.mxu0 %v515
    %1086 = vmatpush.bf16.msra.mxu0 %v512
    %1087 = vmatpush.bf16.msra.mxu0 %v509
    %1088 = vmatpush.bf16.msra.mxu0 %v506
    %1089 = vmatpush.bf16.msra.mxu0 %v503
    %1090 = vmatpush.bf16.msra.mxu0 %v500
    %1091 = vmatpush.bf16.msra.mxu0 %v497
    %1092 = vmatpush.bf16.msra.mxu0 %v494
    %1093 = vmatmul.bf16.gmra.mxu0 %v1058
    %v1094 = vpop.f32.mrf.mxu0
    %v1095 = vadd.f32 %v408, %v1094
    %v1096 = vpop.f32.mrf.mxu0
    %1097 = vdwg.mxu0
    %v1098 = vadd.f32 %v1055, %v1069
    %v1099 = vxor.u32 %v1098, 2147483648
    %v1100 = vmul.f32 %v1099, 1.442695
    %v1101 = vpow.pop %v1100
    %v1102 = vadd.f32 %v1101, 1.0
    %v1103 = vrcp.pop %v1102
    %v1104 = vmul.f32 %v1102, %v1103
    %v1105 = vsub.f32 1.0, %v1104
    %v1106 = vmul.f32 %v1103, %v1105
    %v1107 = vadd.f32 %v1103, %v1106
    %vm1108 = vweird.f32 %v1102
    %vm1109 = vweird.f32 %v1103
    %vm1110 = vmor %vm1108, %vm1109
    %v1111 = vsel %vm1110, %v1103, %v1107
    %v1112 = vand.u32 2147483647, %v1102
    %vm1113 = vcmp.eq.f32.partialorder %v1112, 8.507059e+37
    %v1114 = vand.u32 %v1102, 2147483648
    %v1115 = vor.u32 1.1754944e-38, %v1114
    %v1116 = vsel %vm1113, %v1115, %v1111
    %v1117 = vmul.f32 1.0, %v1116
    %v1118 = vadd.f32 %v1056, %v1082
    %v1119 = vxor.u32 %v1118, 2147483648
    %v1120 = vmul.f32 %v1119, 1.442695
    %v1121 = vpow.pop %v1120
    %v1122 = vadd.f32 %v1121, 1.0
    %v1123 = vrcp.pop %v1122
    %v1124 = vmul.f32 %v1122, %v1123
    %v1125 = vsub.f32 1.0, %v1124
    %v1126 = vmul.f32 %v1123, %v1125
    %v1127 = vadd.f32 %v1123, %v1126
    %vm1128 = vweird.f32 %v1122
    %vm1129 = vweird.f32 %v1123
    %vm1130 = vmor %vm1128, %vm1129
    %v1131 = vsel %vm1130, %v1123, %v1127
    %v1132 = vand.u32 2147483647, %v1122
    %vm1133 = vcmp.eq.f32.partialorder %v1132, 8.507059e+37
    %v1134 = vand.u32 %v1122, 2147483648
    %v1135 = vor.u32 1.1754944e-38, %v1134
    %v1136 = vsel %vm1133, %v1135, %v1131
    %v1137 = vmul.f32 1.0, %v1136
    %v1138 = vmul.f32 %v1117, %v1095
    %v1139 = vadd.f32 %v1057, %v1138
    %v1140 = vtanh.pop %v1139
    %v1141 = vsub.f32 1.0, %v1137
    %v1142 = vmul.f32 %v1141, %v1140
    %v1143 = vmul.f32 %v1137, %v1051
    %v1144 = vadd.f32 %v1142, %v1143
    %vm1145 = vcmp.gt.s32.totalorder %v396, 5
    %v1146 = vsel %vm1145, 1, 0
    %1147 = vset.pattern.permute.xlu0 0
    %1148 = vperm.xlu0 %1147, %v1146
    %v1149 = vpop.permute.xlu0 %1148
    %vm1150 = vcmp.eq.s32.totalorder %v1149, 1
    %v1151 = vsel %vm1150, %v1144, %v1051
    %1152 = vst [vmem:[#allocation3] sm:$0xff] %v1151
    %s1153 = scalar_lea.vmem [#allocation10], 40
    %1154 = vst [vmem:[%s1153] sm:$0xff] %v1151
    %v1155 = vld [vmem:[#allocation3] sm:$0xff]
    %s1156 = smul.u32 6, 3
    %s1157 = smul.addr %s1156, 8
    %s1158 = scalar_lea.vmem [#allocation2], %s1157
    %v1159 = vld [vmem:[%s1158] sm:$0xff]
    %v1160 = vld [vmem:[%s1158 + $0x8] sm:$0xff]
    %v1161 = vld [vmem:[%s1158 + $0x10] sm:$0xff]
    %v1162 = vpack.c.bf16 %v1155, %v1155
    %1163 = vmatpush.bf16.msra.mxu0 %v513
    %1164 = vmatpush.bf16.msra.mxu0 %v510
    %1165 = vmatpush.bf16.msra.mxu0 %v507
    %1166 = vmatpush.bf16.msra.mxu0 %v504
    %1167 = vmatpush.bf16.msra.mxu0 %v501
    %1168 = vmatpush.bf16.msra.mxu0 %v498
    %1169 = vmatpush.bf16.msra.mxu0 %v495
    %1170 = vmatpush.bf16.msra.mxu0 %v492
    %1171 = vmatmul.bf16.gmra.mxu0 %v1162
    %v1172 = vpop.f32.mrf.mxu0
    %v1173 = vadd.f32 %v406, %v1172
    %v1174 = vpop.f32.mrf.mxu0
    %1175 = vdwg.mxu0
    %1176 = vmatpush.bf16.msra.mxu0 %v514
    %1177 = vmatpush.bf16.msra.mxu0 %v511
    %1178 = vmatpush.bf16.msra.mxu0 %v508
    %1179 = vmatpush.bf16.msra.mxu0 %v505
    %1180 = vmatpush.bf16.msra.mxu0 %v502
    %1181 = vmatpush.bf16.msra.mxu0 %v499
    %1182 = vmatpush.bf16.msra.mxu0 %v496
    %1183 = vmatpush.bf16.msra.mxu0 %v493
    %1184 = vmatmul.bf16.gmra.mxu0 %v1162
    %v1185 = vpop.f32.mrf.mxu0
    %v1186 = vadd.f32 %v407, %v1185
    %v1187 = vpop.f32.mrf.mxu0
    %1188 = vdwg.mxu0
    %1189 = vmatpush.bf16.msra.mxu0 %v515
    %1190 = vmatpush.bf16.msra.mxu0 %v512
    %1191 = vmatpush.bf16.msra.mxu0 %v509
    %1192 = vmatpush.bf16.msra.mxu0 %v506
    %1193 = vmatpush.bf16.msra.mxu0 %v503
    %1194 = vmatpush.bf16.msra.mxu0 %v500
    %1195 = vmatpush.bf16.msra.mxu0 %v497
    %1196 = vmatpush.bf16.msra.mxu0 %v494
    %1197 = vmatmul.bf16.gmra.mxu0 %v1162
    %v1198 = vpop.f32.mrf.mxu0
    %v1199 = vadd.f32 %v408, %v1198
    %v1200 = vpop.f32.mrf.mxu0
    %1201 = vdwg.mxu0
    %v1202 = vadd.f32 %v1159, %v1173
    %v1203 = vxor.u32 %v1202, 2147483648
    %v1204 = vmul.f32 %v1203, 1.442695
    %v1205 = vpow.pop %v1204
    %v1206 = vadd.f32 %v1205, 1.0
    %v1207 = vrcp.pop %v1206
    %v1208 = vmul.f32 %v1206, %v1207
    %v1209 = vsub.f32 1.0, %v1208
    %v1210 = vmul.f32 %v1207, %v1209
    %v1211 = vadd.f32 %v1207, %v1210
    %vm1212 = vweird.f32 %v1206
    %vm1213 = vweird.f32 %v1207
    %vm1214 = vmor %vm1212, %vm1213
    %v1215 = vsel %vm1214, %v1207, %v1211
    %v1216 = vand.u32 2147483647, %v1206
    %vm1217 = vcmp.eq.f32.partialorder %v1216, 8.507059e+37
    %v1218 = vand.u32 %v1206, 2147483648
    %v1219 = vor.u32 1.1754944e-38, %v1218
    %v1220 = vsel %vm1217, %v1219, %v1215
    %v1221 = vmul.f32 1.0, %v1220
    %v1222 = vadd.f32 %v1160, %v1186
    %v1223 = vxor.u32 %v1222, 2147483648
    %v1224 = vmul.f32 %v1223, 1.442695
    %v1225 = vpow.pop %v1224
    %v1226 = vadd.f32 %v1225, 1.0
    %v1227 = vrcp.pop %v1226
    %v1228 = vmul.f32 %v1226, %v1227
    %v1229 = vsub.f32 1.0, %v1228
    %v1230 = vmul.f32 %v1227, %v1229
    %v1231 = vadd.f32 %v1227, %v1230
    %vm1232 = vweird.f32 %v1226
    %vm1233 = vweird.f32 %v1227
    %vm1234 = vmor %vm1232, %vm1233
    %v1235 = vsel %vm1234, %v1227, %v1231
    %v1236 = vand.u32 2147483647, %v1226
    %vm1237 = vcmp.eq.f32.partialorder %v1236, 8.507059e+37
    %v1238 = vand.u32 %v1226, 2147483648
    %v1239 = vor.u32 1.1754944e-38, %v1238
    %v1240 = vsel %vm1237, %v1239, %v1235
    %v1241 = vmul.f32 1.0, %v1240
    %v1242 = vmul.f32 %v1221, %v1199
    %v1243 = vadd.f32 %v1161, %v1242
    %v1244 = vtanh.pop %v1243
    %v1245 = vsub.f32 1.0, %v1241
    %v1246 = vmul.f32 %v1245, %v1244
    %v1247 = vmul.f32 %v1241, %v1155
    %v1248 = vadd.f32 %v1246, %v1247
    %vm1249 = vcmp.gt.s32.totalorder %v396, 6
    %v1250 = vsel %vm1249, 1, 0
    %1251 = vset.pattern.permute.xlu0 0
    %1252 = vperm.xlu0 %1251, %v1250
    %v1253 = vpop.permute.xlu0 %1252
    %vm1254 = vcmp.eq.s32.totalorder %v1253, 1
    %v1255 = vsel %vm1254, %v1248, %v1155
    %1256 = vst [vmem:[#allocation3] sm:$0xff] %v1255
    %s1257 = scalar_lea.vmem [#allocation10], 48
    %1258 = vst [vmem:[%s1257] sm:$0xff] %v1255
    %v1259 = vld [vmem:[#allocation3] sm:$0xff]
    %s1260 = smul.u32 7, 3
    %s1261 = smul.addr %s1260, 8
    %s1262 = scalar_lea.vmem [#allocation2], %s1261
    %v1263 = vld [vmem:[%s1262] sm:$0xff]
    %v1264 = vld [vmem:[%s1262 + $0x8] sm:$0xff]
    %v1265 = vld [vmem:[%s1262 + $0x10] sm:$0xff]
    %v1266 = vpack.c.bf16 %v1259, %v1259
    %1267 = vmatpush.bf16.msra.mxu0 %v513
    %1268 = vmatpush.bf16.msra.mxu0 %v510
    %1269 = vmatpush.bf16.msra.mxu0 %v507
    %1270 = vmatpush.bf16.msra.mxu0 %v504
    %1271 = vmatpush.bf16.msra.mxu0 %v501
    %1272 = vmatpush.bf16.msra.mxu0 %v498
    %1273 = vmatpush.bf16.msra.mxu0 %v495
    %1274 = vmatpush.bf16.msra.mxu0 %v492
    %1275 = vmatmul.bf16.gmra.mxu0 %v1266
    %v1276 = vpop.f32.mrf.mxu0
    %v1277 = vadd.f32 %v406, %v1276
    %v1278 = vpop.f32.mrf.mxu0
    %1279 = vdwg.mxu0
    %1280 = vmatpush.bf16.msra.mxu0 %v514
    %1281 = vmatpush.bf16.msra.mxu0 %v511
    %1282 = vmatpush.bf16.msra.mxu0 %v508
    %1283 = vmatpush.bf16.msra.mxu0 %v505
    %1284 = vmatpush.bf16.msra.mxu0 %v502
    %1285 = vmatpush.bf16.msra.mxu0 %v499
    %1286 = vmatpush.bf16.msra.mxu0 %v496
    %1287 = vmatpush.bf16.msra.mxu0 %v493
    %1288 = vmatmul.bf16.gmra.mxu0 %v1266
    %v1289 = vpop.f32.mrf.mxu0
    %v1290 = vadd.f32 %v407, %v1289
    %v1291 = vpop.f32.mrf.mxu0
    %1292 = vdwg.mxu0
    %1293 = vmatpush.bf16.msra.mxu0 %v515
    %1294 = vmatpush.bf16.msra.mxu0 %v512
    %1295 = vmatpush.bf16.msra.mxu0 %v509
    %1296 = vmatpush.bf16.msra.mxu0 %v506
    %1297 = vmatpush.bf16.msra.mxu0 %v503
    %1298 = vmatpush.bf16.msra.mxu0 %v500
    %1299 = vmatpush.bf16.msra.mxu0 %v497
    %1300 = vmatpush.bf16.msra.mxu0 %v494
    %1301 = vmatmul.bf16.gmra.mxu0 %v1266
    %v1302 = vpop.f32.mrf.mxu0
    %v1303 = vadd.f32 %v408, %v1302
    %v1304 = vpop.f32.mrf.mxu0
    %1305 = vdwg.mxu0
    %v1306 = vadd.f32 %v1263, %v1277
    %v1307 = vxor.u32 %v1306, 2147483648
    %v1308 = vmul.f32 %v1307, 1.442695
    %v1309 = vpow.pop %v1308
    %v1310 = vadd.f32 %v1309, 1.0
    %v1311 = vrcp.pop %v1310
    %v1312 = vmul.f32 %v1310, %v1311
    %v1313 = vsub.f32 1.0, %v1312
    %v1314 = vmul.f32 %v1311, %v1313
    %v1315 = vadd.f32 %v1311, %v1314
    %vm1316 = vweird.f32 %v1310
    %vm1317 = vweird.f32 %v1311
    %vm1318 = vmor %vm1316, %vm1317
    %v1319 = vsel %vm1318, %v1311, %v1315
    %v1320 = vand.u32 2147483647, %v1310
    %vm1321 = vcmp.eq.f32.partialorder %v1320, 8.507059e+37
    %v1322 = vand.u32 %v1310, 2147483648
    %v1323 = vor.u32 1.1754944e-38, %v1322
    %v1324 = vsel %vm1321, %v1323, %v1319
    %v1325 = vmul.f32 1.0, %v1324
    %v1326 = vadd.f32 %v1264, %v1290
    %v1327 = vxor.u32 %v1326, 2147483648
    %v1328 = vmul.f32 %v1327, 1.442695
    %v1329 = vpow.pop %v1328
    %v1330 = vadd.f32 %v1329, 1.0
    %v1331 = vrcp.pop %v1330
    %v1332 = vmul.f32 %v1330, %v1331
    %v1333 = vsub.f32 1.0, %v1332
    %v1334 = vmul.f32 %v1331, %v1333
    %v1335 = vadd.f32 %v1331, %v1334
    %vm1336 = vweird.f32 %v1330
    %vm1337 = vweird.f32 %v1331
    %vm1338 = vmor %vm1336, %vm1337
    %v1339 = vsel %vm1338, %v1331, %v1335
    %v1340 = vand.u32 2147483647, %v1330
    %vm1341 = vcmp.eq.f32.partialorder %v1340, 8.507059e+37
    %v1342 = vand.u32 %v1330, 2147483648
    %v1343 = vor.u32 1.1754944e-38, %v1342
    %v1344 = vsel %vm1341, %v1343, %v1339
    %v1345 = vmul.f32 1.0, %v1344
    %v1346 = vmul.f32 %v1325, %v1303
    %v1347 = vadd.f32 %v1265, %v1346
    %v1348 = vtanh.pop %v1347
    %v1349 = vsub.f32 1.0, %v1345
    %v1350 = vmul.f32 %v1349, %v1348
    %v1351 = vmul.f32 %v1345, %v1259
    %v1352 = vadd.f32 %v1350, %v1351
    %vm1353 = vcmp.gt.s32.totalorder %v396, 7
    %v1354 = vsel %vm1353, 1, 0
    %1355 = vset.pattern.permute.xlu0 0
    %1356 = vperm.xlu0 %1355, %v1354
    %v1357 = vpop.permute.xlu0 %1356
    %vm1358 = vcmp.eq.s32.totalorder %v1357, 1
    %v1359 = vsel %vm1358, %v1352, %v1259
    %1360 = vst [vmem:[#allocation3] sm:$0xff] %v1359
    %s1361 = scalar_lea.vmem [#allocation10], 56
    %1362 = vst [vmem:[%s1361] sm:$0xff] %v1359
    // Predicated region
    $region38: #{tpu_custom_call.1} parent=1 // pred_check
      _
    $region39: #{tpu_custom_call.1} parent=1 // pred_check_branch
      %1364 = sbr.rel (0) target = $region41
    $region40: #{tpu_custom_call.1} parent=1 // pred_region
      %1366 = vsyncadd [#allocation6], 0
      %s1367 = sshll.u32 [#allocation10], 4
      %s1368 = int_to_ptr.vmem [resolvable:$true] %s1367
      %s1369 = sshll.u32 %s6, 4
      %s1370 = int_to_ptr.hbm [resolvable:$true] %s1369
      %1375 = dma.vmem_to_hbm [thread:$0]  %s1368, 1024, %s1370, [#allocation6], 128, 128, 8
    $region41: #{tpu_custom_call.1} parent=1 // pred_fallthru
      _
    // Predicated region
    $region42: #{tpu_custom_call.1} parent=1 // pred_check
      _
    $region43: #{tpu_custom_call.1} parent=1 // pred_check_branch
      %1377 = sbr.rel (0) target = $region45
    $region44: #{tpu_custom_call.1} parent=1 // pred_region
      %1379 = dma.done [#allocation6], 1024
    $region45: #{tpu_custom_call.1} parent=1 // pred_fallthru
      _
    %1380 = vsyncpa [#allocation5], 1
    %1381 = vsyncpa [#allocation8], 1
    %1382 = vsyncpa [#allocation6], 1

</llo_original>
